<compile_context>
chip_gen: v7x
topology: tpu7x:2x2x1
jax: 0.10.0
libtpu: 0.0.40
codegen_flags: <defaults>
</compile_context>

<pallas_src>
import jax
import jax.numpy as jnp
import numpy as np
from jax.experimental import pallas as pl
from jax.experimental.pallas import tpu as pltpu

# ---- encoder_config (small, deterministic synthetic setup) ----
DIM_FEATURE = 8                      # dim_feature
KERNEL_SIZE = 6                      # kernel_size
HIDDEN_SIZE = 32                     # hidden_size
NUM_LAYERS  = 2                      # num_layers (baked into the fused kernel below)
STRIDE      = 2                      # stride
PAD         = (KERNEL_SIZE - 4) // 2 # nn.Unfold padding along time
GATE_PAD    = 128                    # 3*H = 96 padded up to a full 128-lane tile


# ----------------------------------------------------------------------------
# Fused Pallas kernel.  PyTorch GRU gate equations (gate order r, z, n):
#   r = sig(Wir x + bir + Whr h + bhr)
#   z = sig(Wiz x + biz + Whz h + bhz)
#   n = tanh(Win x + bin + r * (Whn h + bhn))
#   h = (1 - z) * n + z * h
# (bhr, bhz are folded into bir, biz offline; bhn stays separate.)
# ----------------------------------------------------------------------------
def make_fused_kernel(T, L, B, F, H, GP, K):
    f32 = jnp.float32
    bf16 = jnp.bfloat16
    TWOH = 2 * H

    def kernel(src_ref, inp_ref, wall_ref, whh_ref, bias_ref, o_ref, p_scr):
        # ---- input network: Linear + Softsign (Dropout = identity at inference) ----
        x = src_ref[...]                                      # (T*B, F) f32
        w_in_t = inp_ref[0:F, :]                              # (F, F)
        b_in = inp_ref[F:F + 1, :]                            # (1, F)
        y = jnp.dot(x, w_in_t, preferred_element_type=f32) + b_in
        emb = y / (1.0 + jnp.abs(y))                          # Softsign

        # ---- nn.Unfold folded into ONE tap-concatenated matmul ----
        # P[row, k*GP:(k+1)*GP] = emb[row, :] @ Wk   (pad lanes carry zeros)
        p_scr[...] = jnp.dot(emb.astype(bf16), wall_ref[...],
                             preferred_element_type=f32)      # (T*B, K*GP)

        # ---- weights / biases loaded & broadcast ONCE (hoisted off the step path) ----
        whh1_t = whh_ref[0]                                   # (H, GP) bf16
        wih2_t = whh_ref[1]
        whh2_t = whh_ref[2]
        bih1_b = jnp.broadcast_to(bias_ref[0:1, :], (B, GP))  # bhh1 r/z folded in
        bhh1_n = jnp.broadcast_to(bias_ref[1:2, :], (B, GP))  # zeros except n lanes
        bih2_b = jnp.broadcast_to(bias_ref[2:3, :], (B, GP))  # bhh2 r/z folded in
        bhh2_n = jnp.broadcast_to(bias_ref[3:4, :], (B, GP))

        # gi1_l = bih1 + sum_k P[t(l,k)*B:(t+1)*B, k*GP:(k+1)*GP]
        # (out-of-range taps are the unfold's zero time padding -> skipped statically)
        gi1 = []
        for l in range(L):                                    # L=7, static
            acc = bih1_b
            for k in range(K):                                # K=6, static
                t = l * STRIDE + k - PAD
                if 0 <= t < T:
                    acc = acc + p_scr[t * B:(t + 1) * B, k * GP:(k + 1) * GP]
            gi1.append(acc)

        def gru_step(gi_l, h, whh_t, bhh_n_b):
            gh = jnp.dot(h.astype(bf16), whh_t, preferred_element_type=f32) + bhh_n_b
            s = jax.nn.sigmoid(gi_l + gh)                     # full 128-wide tile
            r = s[:, 0:H]
            z = s[:, H:TWOH]
            n = jnp.tanh(gi_l[:, TWOH:TWOH + H] + r * gh[:, TWOH:TWOH + H])
            return (1.0 - z) * n + z * h

        # ---- interleaved (wavefront) 2-layer recurrence, fully unrolled ----
        h1 = jnp.zeros((B, H), f32)
        h2 = jnp.zeros((B, H), f32)
        outs = []
        for l in range(L):
            h1 = gru_step(gi1[l], h1, whh1_t, bhh1_n)
            gi2_l = jnp.dot(h1.astype(bf16), wih2_t, preferred_element_type=f32) + bih2_b
            h2 = gru_step(gi2_l, h2, whh2_t, bhh2_n)
            outs.append(h2)

        # layer-2 outputs stayed in vregs; single writeback at the end
        o_ref[...] = jnp.concatenate(outs, axis=0)            # (L*B, H)

    return kernel


# ----------------------------------------------------------------------------
# One-time parameter preparation (pre-transpose, gate padding, tap concat,
# bias folding, bf16 weight cast, DMA packing)
# ----------------------------------------------------------------------------
def prepare_params(w_in, b_in, gru_params):
    F, K, H, GP = DIM_FEATURE, KERNEL_SIZE, HIDDEN_SIZE, GATE_PAD
    assert len(gru_params) == NUM_LAYERS == 2   # fused kernel is specialized to 2 layers
    (wih1, whh1, bih1, bhh1), (wih2, whh2, bih2, bhh2) = gru_params

    def padg(a):  # zero-pad last dim 3H -> GP
        a = jnp.asarray(a, jnp.float32)
        return jnp.pad(a, [(0, 0)] * (a.ndim - 1) + [(0, GP - 3 * H)])

    # layer-1 input weights: torch (3H, F*K), column index c = f*K + k
    #  -> per-tap Wk^T (K, F, GP), concatenated along lanes -> Wall (F, K*GP), bf16
    wk1 = padg(jnp.transpose(jnp.asarray(wih1, jnp.float32).T.reshape(F, K, 3 * H),
                             (1, 0, 2)))                              # (K, F, GP)
    wall = jnp.transpose(wk1, (1, 0, 2)).reshape(F, K * GP).astype(jnp.bfloat16)

    whh1_t = padg(jnp.asarray(whh1).T)                                # (H, GP)
    wih2_t = padg(jnp.asarray(wih2).T)
    whh2_t = padg(jnp.asarray(whh2).T)
    whh_stack = jnp.stack([whh1_t, wih2_t, whh2_t], axis=0).astype(jnp.bfloat16)

    # bias folding: r/z parts of bhh go into bih; only the n-gate hidden bias stays
    def fold(bih_, bhh_):
        bih_ = jnp.asarray(bih_, jnp.float32)
        bhh_ = jnp.asarray(bhh_, jnp.float32)
        bih_f = bih_.at[:2 * H].add(bhh_[:2 * H])
        bhh_n = bhh_.at[:2 * H].set(0.0)
        return padg(bih_f.reshape(1, 3 * H)), padg(bhh_n.reshape(1, 3 * H))

    bih1_f, bhh1_n = fold(bih1, bhh1)
    bih2_f, bhh2_n = fold(bih2, bhh2)
    biases = jnp.concatenate([bih1_f, bhh1_n, bih2_f, bhh2_n], axis=0)   # (4, GP) f32

    # input network packed into one (F+1, F) block: rows 0..F-1 = W^T, row F = bias
    inp_net = jnp.concatenate([jnp.asarray(w_in, jnp.float32).T,
                               jnp.asarray(b_in, jnp.float32).reshape(1, F)], axis=0)

    return (inp_net, wall, whh_stack, biases)


# ----------------------------------------------------------------------------
# Forward: one pallas_call for the whole module
# ----------------------------------------------------------------------------
def bgru_forward(src, params):
    inp_net, wall, whh_stack, biases = params
    T, B, F = src.shape
    K, H, GP = KERNEL_SIZE, HIDDEN_SIZE, GATE_PAD
    L = (T + 2 * PAD - K) // STRIDE + 1
    src2 = src.reshape(T * B, F)

    out_flat = pl.pallas_call(
        make_fused_kernel(T, L, B, F, H, GP, K),
        out_shape=jax.ShapeDtypeStruct((L * B, H), jnp.float32),
        grid_spec=pltpu.PrefetchScalarGridSpec(
            num_scalar_prefetch=0,
            grid=(1,),
            in_specs=[
                pl.BlockSpec((T * B, F), lambda i: (0, 0)),        # src (flattened)
                pl.BlockSpec((F + 1, F), lambda i: (0, 0)),        # input-net W^T | b
                pl.BlockSpec((F, K * GP), lambda i: (0, 0)),       # Wall (bf16, padded)
                pl.BlockSpec((3, H, GP), lambda i: (0, 0, 0)),     # whh1^T|wih2^T|whh2^T
                pl.BlockSpec((4, GP), lambda i: (0, 0)),           # folded biases
            ],
            out_specs=pl.BlockSpec((L * B, H), lambda i: (0, 0)),
            scratch_shapes=[pltpu.VMEM((T * B, K * GP), jnp.float32)],  # P scratch
        ),
        compiler_params=pltpu.CompilerParams(
            dimension_semantics=("arbitrary",)),
    )(src2, inp_net, wall, whh_stack, biases)

    return out_flat.reshape(L, B, H)                               # (L, B, HIDDEN_SIZE)


# ----------------------------------------------------------------------------
# Pure-JAX reference for verification (PyTorch-faithful computation)
# ----------------------------------------------------------------------------
def unfold_patches(emb):
    """nn.Unfold((K,1), padding=(PAD,0), stride=(STRIDE,1)) on emb.permute(1,2,0)
    followed by .permute(2,0,1). emb: (T, B, F) -> (L, B, F*K)."""
    T, B, F = emb.shape
    x_bft = jnp.transpose(emb, (1, 2, 0))                   # (B, F, T)
    x_pad = jnp.pad(x_bft, ((0, 0), (0, 0), (PAD, PAD)))    # zero padding along time
    Tp = T + 2 * PAD
    L = (Tp - KERNEL_SIZE) // STRIDE + 1
    idx = jnp.arange(L)[:, None] * STRIDE + jnp.arange(KERNEL_SIZE)[None, :]  # (L, K)
    patches = x_pad[:, :, idx]                              # (B, F, L, K)
    # unfold channel order = f*K + k  ->  (L, B, F*K)
    return jnp.transpose(patches, (2, 0, 1, 3)).reshape(L, B, F * KERNEL_SIZE)


def _ref_gru_layer(x_seq, wih, whh, bih, bhh):
    H = whh.shape[1]
    B = x_seq.shape[1]
    hp = jax.lax.Precision.HIGHEST

    def step(h, x):
        gi = jnp.dot(x, wih.T, precision=hp) + bih
        gh = jnp.dot(h, whh.T, precision=hp) + bhh
        r = jax.nn.sigmoid(gi[:, :H] + gh[:, :H])
        z = jax.nn.sigmoid(gi[:, H:2 * H] + gh[:, H:2 * H])
        n = jnp.tanh(gi[:, 2 * H:] + r * gh[:, 2 * H:])
        h_new = (1.0 - z) * n + z * h
        return h_new, h_new

    h0 = jnp.zeros((B, H), jnp.float32)
    _, ys = jax.lax.scan(step, h0, x_seq)
    return ys


def ref_forward(src, w_in, b_in, gru_params):
    hp = jax.lax.Precision.HIGHEST
    y = jnp.dot(src, w_in.T, precision=hp) + b_in
    emb = y / (1.0 + jnp.abs(y))
    out = unfold_patches(emb)
    for (wih, whh, bih, bhh) in gru_params:
        out = _ref_gru_layer(out, wih, whh, bih, bhh)
    return out


# ----------------------------------------------------------------------------
if __name__ == "__main__":
    T, B = 16, 2
    F, K, H = DIM_FEATURE, KERNEL_SIZE, HIDDEN_SIZE

    key = jax.random.PRNGKey(0)
    key, k_src, k_bin = jax.random.split(key, 3)
    src = jax.random.normal(k_src, (T, B, F), dtype=jnp.float32)

    # input network params (nn.init.eye_ on the Linear weight, small random bias)
    w_in = jnp.eye(F, dtype=jnp.float32)
    b_in = 0.1 * jax.random.normal(k_bin, (F,), dtype=jnp.float32)

    # GRU params (deterministic synthetic init; torch-style shapes)
    gru_params = []
    in_dim = F * K
    for _ in range(NUM_LAYERS):
        key, k1, k2, k3, k4 = jax.random.split(key, 5)
        wih = 0.3 * jax.random.normal(k1, (3 * H, in_dim), dtype=jnp.float32)
        whh = 0.3 * jax.random.normal(k2, (3 * H, H), dtype=jnp.float32)
        bih = 0.1 * jax.random.normal(k3, (3 * H,), dtype=jnp.float32)
        bhh = 0.1 * jax.random.normal(k4, (3 * H,), dtype=jnp.float32)
        gru_params.append((wih, whh, bih, bhh))
        in_dim = H

    # one-time weight prep (tap concat / gate-pad / bias fold / bf16 / DMA packing)
    params = prepare_params(w_in, b_in, gru_params)

    fwd = jax.jit(bgru_forward)
    out = jax.block_until_ready(fwd(src, params))

    L = (T + 2 * PAD - K) // STRIDE + 1
    assert out.shape == (L, B, H), out.shape

    ref = jax.block_until_ready(ref_forward(src, w_in, b_in, gru_params))
    # tolerance slightly looser than before because matmul weights are bf16 on the MXU
    # (f32 accumulate); reference uses f32 HIGHEST precision.
    np.testing.assert_allclose(np.asarray(out), np.asarray(ref), rtol=3e-2, atol=3e-2)

    print("KERNEL_OK")
</pallas_src>

<mosaic_0001>
module attributes {stable_mosaic.version = 11 : i64} {
  func.func @kernel(%arg0: i32, %arg1: memref<32x8xf32, #tpu.memory_space<vmem>>, %arg2: memref<9x8xf32, #tpu.memory_space<vmem>>, %arg3: memref<8x768xbf16, #tpu.memory_space<vmem>>, %arg4: memref<3x32x128xbf16, #tpu.memory_space<vmem>>, %arg5: memref<4x128xf32, #tpu.memory_space<vmem>>, %arg6: memref<14x32xf32, #tpu.memory_space<vmem>>, %arg7: memref<32x768xf32, #tpu.memory_space<vmem>>) attributes {dimension_semantics = [#tpu.dimension_semantics<arbitrary>], iteration_bounds = array<i64: 1>, scalar_prefetch = 0 : i64, scratch_operands = 1 : i64, tpu.core_type = #tpu.core_type<tc>, window_params = [{pipeline_mode = #tpu.pipeline_mode<synchronous>, transform_indices = @transform_0, window_bounds = array<i64: 32, 8>}, {pipeline_mode = #tpu.pipeline_mode<synchronous>, transform_indices = @transform_1, window_bounds = array<i64: 9, 8>}, {pipeline_mode = #tpu.pipeline_mode<synchronous>, transform_indices = @transform_2, window_bounds = array<i64: 8, 768>}, {pipeline_mode = #tpu.pipeline_mode<synchronous>, transform_indices = @transform_3, window_bounds = array<i64: 3, 32, 128>}, {pipeline_mode = #tpu.pipeline_mode<synchronous>, transform_indices = @transform_4, window_bounds = array<i64: 4, 128>}, {pipeline_mode = #tpu.pipeline_mode<synchronous>, transform_indices = @transform_5, window_bounds = array<i64: 14, 32>}]} {
    %c0 = arith.constant 0 : index
    %c0_0 = arith.constant 0 : index
    %0 = vector.load %arg1[%c0, %c0_0] : memref<32x8xf32, #tpu.memory_space<vmem>>, vector<32x8xf32>
    %c0_1 = arith.constant 0 : index
    %c0_2 = arith.constant 0 : index
    %1 = vector.load %arg2[%c0_1, %c0_2] : memref<9x8xf32, #tpu.memory_space<vmem>>, vector<8x8xf32>
    %c8 = arith.constant 8 : index
    %c0_3 = arith.constant 0 : index
    %2 = vector.load %arg2[%c8, %c0_3] : memref<9x8xf32, #tpu.memory_space<vmem>>, vector<1x8xf32>
    %cst = arith.constant dense<0.000000e+00> : vector<32x8xf32>
    %3 = tpu.matmul %0, %1, %cst {dimension_numbers = #tpu.dot_dimension_numbers<[1], [0], [0], [1], [0, 0, 1, 1], [], []>} : vector<32x8xf32>, vector<8x8xf32>, vector<32x8xf32> -> vector<32x8xf32>
    %4 = vector.broadcast %2 : vector<1x8xf32> to vector<32x8xf32>
    %5 = arith.addf %3, %4 : vector<32x8xf32>
    %6 = math.absf %5 : vector<32x8xf32>
    %cst_4 = arith.constant 1.000000e+00 : f32
    %7 = vector.broadcast %cst_4 : f32 to vector<32x8xf32>
    %8 = arith.addf %7, %6 : vector<32x8xf32>
    %9 = arith.divf %5, %8 : vector<32x8xf32>
    %10 = arith.truncf %9 : vector<32x8xf32> to vector<32x8xbf16>
    %c0_5 = arith.constant 0 : index
    %c0_6 = arith.constant 0 : index
    %11 = vector.load %arg3[%c0_5, %c0_6] : memref<8x768xbf16, #tpu.memory_space<vmem>>, vector<8x768xbf16>
    %cst_7 = arith.constant dense<0.000000e+00> : vector<32x768xf32>
    %12 = tpu.matmul %10, %11, %cst_7 {dimension_numbers = #tpu.dot_dimension_numbers<[1], [0], [0], [1], [0, 0, 1, 1], [], []>} : vector<32x8xbf16>, vector<8x768xbf16>, vector<32x768xf32> -> vector<32x768xf32>
    %c0_8 = arith.constant 0 : index
    %c0_9 = arith.constant 0 : index
    %13 = vector.load %arg7[%c0_8, %c0_9] : memref<32x768xf32, #tpu.memory_space<vmem>>, vector<32x768xf32>
    tpu.vector_store %arg7[%c0_8, %c0_9], %12 {strides = array<i32>} : memref<32x768xf32, #tpu.memory_space<vmem>>, vector<32x768xf32>,
    %c0_10 = arith.constant 0 : index
    %c0_11 = arith.constant 0 : index
    %c0_12 = arith.constant 0 : index
    %14 = vector.load %arg4[%c0_10, %c0_11, %c0_12] : memref<3x32x128xbf16, #tpu.memory_space<vmem>>, vector<1x32x128xbf16>
    %15 = vector.shape_cast %14 : vector<1x32x128xbf16> to vector<32x128xbf16>
    %c1 = arith.constant 1 : index
    %c0_13 = arith.constant 0 : index
    %c0_14 = arith.constant 0 : index
    %16 = vector.load %arg4[%c1, %c0_13, %c0_14] : memref<3x32x128xbf16, #tpu.memory_space<vmem>>, vector<1x32x128xbf16>
    %17 = vector.shape_cast %16 : vector<1x32x128xbf16> to vector<32x128xbf16>
    %c2 = arith.constant 2 : index
    %c0_15 = arith.constant 0 : index
    %c0_16 = arith.constant 0 : index
    %18 = vector.load %arg4[%c2, %c0_15, %c0_16] : memref<3x32x128xbf16, #tpu.memory_space<vmem>>, vector<1x32x128xbf16>
    %19 = vector.shape_cast %18 : vector<1x32x128xbf16> to vector<32x128xbf16>
    %c0_17 = arith.constant 0 : index
    %c0_18 = arith.constant 0 : index
    %20 = vector.load %arg5[%c0_17, %c0_18] : memref<4x128xf32, #tpu.memory_space<vmem>>, vector<1x128xf32>
    %21 = vector.shape_cast %20 : vector<1x128xf32> to vector<1x128xf32>
    %22 = vector.broadcast %21 : vector<1x128xf32> to vector<2x128xf32>
    %c1_19 = arith.constant 1 : index
    %c0_20 = arith.constant 0 : index
    %23 = vector.load %arg5[%c1_19, %c0_20] : memref<4x128xf32, #tpu.memory_space<vmem>>, vector<1x128xf32>
    %24 = vector.shape_cast %23 : vector<1x128xf32> to vector<1x128xf32>
    %25 = vector.broadcast %24 : vector<1x128xf32> to vector<2x128xf32>
    %c2_21 = arith.constant 2 : index
    %c0_22 = arith.constant 0 : index
    %26 = vector.load %arg5[%c2_21, %c0_22] : memref<4x128xf32, #tpu.memory_space<vmem>>, vector<1x128xf32>
    %27 = vector.shape_cast %26 : vector<1x128xf32> to vector<1x128xf32>
    %28 = vector.broadcast %27 : vector<1x128xf32> to vector<2x128xf32>
    %c3 = arith.constant 3 : index
    %c0_23 = arith.constant 0 : index
    %29 = vector.load %arg5[%c3, %c0_23] : memref<4x128xf32, #tpu.memory_space<vmem>>, vector<1x128xf32>
    %30 = vector.shape_cast %29 : vector<1x128xf32> to vector<1x128xf32>
    %31 = vector.broadcast %30 : vector<1x128xf32> to vector<2x128xf32>
    %c0_24 = arith.constant 0 : index
    %c128 = arith.constant 128 : index
    %32 = vector.load %arg7[%c0_24, %c128] : memref<32x768xf32, #tpu.memory_space<vmem>>, vector<2x128xf32>
    %33 = arith.addf %22, %32 : vector<2x128xf32>
    %c2_25 = arith.constant 2 : index
    %c256 = arith.constant 256 : index
    %34 = vector.load %arg7[%c2_25, %c256] : memref<32x768xf32, #tpu.memory_space<vmem>>, vector<2x128xf32>
    %35 = arith.addf %33, %34 : vector<2x128xf32>
    %c4 = arith.constant 4 : index
    %c384 = arith.constant 384 : index
    %36 = vector.load %arg7[%c4, %c384] : memref<32x768xf32, #tpu.memory_space<vmem>>, vector<2x128xf32>
    %37 = arith.addf %35, %36 : vector<2x128xf32>
    %c6 = arith.constant 6 : index
    %c512 = arith.constant 512 : index
    %38 = vector.load %arg7[%c6, %c512] : memref<32x768xf32, #tpu.memory_space<vmem>>, vector<2x128xf32>
    %39 = arith.addf %37, %38 : vector<2x128xf32>
    %c8_26 = arith.constant 8 : index
    %c640 = arith.constant 640 : index
    %40 = vector.load %arg7[%c8_26, %c640] : memref<32x768xf32, #tpu.memory_space<vmem>>, vector<2x128xf32>
    %41 = arith.addf %39, %40 : vector<2x128xf32>
    %c2_27 = arith.constant 2 : index
    %c0_28 = arith.constant 0 : index
    %42 = vector.load %arg7[%c2_27, %c0_28] : memref<32x768xf32, #tpu.memory_space<vmem>>, vector<2x128xf32>
    %43 = arith.addf %22, %42 : vector<2x128xf32>
    %c4_29 = arith.constant 4 : index
    %c128_30 = arith.constant 128 : index
    %44 = vector.load %arg7[%c4_29, %c128_30] : memref<32x768xf32, #tpu.memory_space<vmem>>, vector<2x128xf32>
    %45 = arith.addf %43, %44 : vector<2x128xf32>
    %c6_31 = arith.constant 6 : index
    %c256_32 = arith.constant 256 : index
    %46 = vector.load %arg7[%c6_31, %c256_32] : memref<32x768xf32, #tpu.memory_space<vmem>>, vector<2x128xf32>
    %47 = arith.addf %45, %46 : vector<2x128xf32>
    %c8_33 = arith.constant 8 : index
    %c384_34 = arith.constant 384 : index
    %48 = vector.load %arg7[%c8_33, %c384_34] : memref<32x768xf32, #tpu.memory_space<vmem>>, vector<2x128xf32>
    %49 = arith.addf %47, %48 : vector<2x128xf32>
    %c10 = arith.constant 10 : index
    %c512_35 = arith.constant 512 : index
    %50 = vector.load %arg7[%c10, %c512_35] : memref<32x768xf32, #tpu.memory_space<vmem>>, vector<2x128xf32>
    %51 = arith.addf %49, %50 : vector<2x128xf32>
    %c12 = arith.constant 12 : index
    %c640_36 = arith.constant 640 : index
    %52 = vector.load %arg7[%c12, %c640_36] : memref<32x768xf32, #tpu.memory_space<vmem>>, vector<2x128xf32>
    %53 = arith.addf %51, %52 : vector<2x128xf32>
    %c6_37 = arith.constant 6 : index
    %c0_38 = arith.constant 0 : index
    %54 = vector.load %arg7[%c6_37, %c0_38] : memref<32x768xf32, #tpu.memory_space<vmem>>, vector<2x128xf32>
    %55 = arith.addf %22, %54 : vector<2x128xf32>
    %c8_39 = arith.constant 8 : index
    %c128_40 = arith.constant 128 : index
    %56 = vector.load %arg7[%c8_39, %c128_40] : memref<32x768xf32, #tpu.memory_space<vmem>>, vector<2x128xf32>
    %57 = arith.addf %55, %56 : vector<2x128xf32>
    %c10_41 = arith.constant 10 : index
    %c256_42 = arith.constant 256 : index
    %58 = vector.load %arg7[%c10_41, %c256_42] : memref<32x768xf32, #tpu.memory_space<vmem>>, vector<2x128xf32>
    %59 = arith.addf %57, %58 : vector<2x128xf32>
    %c12_43 = arith.constant 12 : index
    %c384_44 = arith.constant 384 : index
    %60 = vector.load %arg7[%c12_43, %c384_44] : memref<32x768xf32, #tpu.memory_space<vmem>>, vector<2x128xf32>
    %61 = arith.addf %59, %60 : vector<2x128xf32>
    %c14 = arith.constant 14 : index
    %c512_45 = arith.constant 512 : index
    %62 = vector.load %arg7[%c14, %c512_45] : memref<32x768xf32, #tpu.memory_space<vmem>>, vector<2x128xf32>
    %63 = arith.addf %61, %62 : vector<2x128xf32>
    %c16 = arith.constant 16 : index
    %c640_46 = arith.constant 640 : index
    %64 = vector.load %arg7[%c16, %c640_46] : memref<32x768xf32, #tpu.memory_space<vmem>>, vector<2x128xf32>
    %65 = arith.addf %63, %64 : vector<2x128xf32>
    %c10_47 = arith.constant 10 : index
    %c0_48 = arith.constant 0 : index
    %66 = vector.load %arg7[%c10_47, %c0_48] : memref<32x768xf32, #tpu.memory_space<vmem>>, vector<2x128xf32>
    %67 = arith.addf %22, %66 : vector<2x128xf32>
    %c12_49 = arith.constant 12 : index
    %c128_50 = arith.constant 128 : index
    %68 = vector.load %arg7[%c12_49, %c128_50] : memref<32x768xf32, #tpu.memory_space<vmem>>, vector<2x128xf32>
    %69 = arith.addf %67, %68 : vector<2x128xf32>
    %c14_51 = arith.constant 14 : index
    %c256_52 = arith.constant 256 : index
    %70 = vector.load %arg7[%c14_51, %c256_52] : memref<32x768xf32, #tpu.memory_space<vmem>>, vector<2x128xf32>
    %71 = arith.addf %69, %70 : vector<2x128xf32>
    %c16_53 = arith.constant 16 : index
    %c384_54 = arith.constant 384 : index
    %72 = vector.load %arg7[%c16_53, %c384_54] : memref<32x768xf32, #tpu.memory_space<vmem>>, vector<2x128xf32>
    %73 = arith.addf %71, %72 : vector<2x128xf32>
    %c18 = arith.constant 18 : index
    %c512_55 = arith.constant 512 : index
    %74 = vector.load %arg7[%c18, %c512_55] : memref<32x768xf32, #tpu.memory_space<vmem>>, vector<2x128xf32>
    %75 = arith.addf %73, %74 : vector<2x128xf32>
    %c20 = arith.constant 20 : index
    %c640_56 = arith.constant 640 : index
    %76 = vector.load %arg7[%c20, %c640_56] : memref<32x768xf32, #tpu.memory_space<vmem>>, vector<2x128xf32>
    %77 = arith.addf %75, %76 : vector<2x128xf32>
    %c14_57 = arith.constant 14 : index
    %c0_58 = arith.constant 0 : index
    %78 = vector.load %arg7[%c14_57, %c0_58] : memref<32x768xf32, #tpu.memory_space<vmem>>, vector<2x128xf32>
    %79 = arith.addf %22, %78 : vector<2x128xf32>
    %c16_59 = arith.constant 16 : index
    %c128_60 = arith.constant 128 : index
    %80 = vector.load %arg7[%c16_59, %c128_60] : memref<32x768xf32, #tpu.memory_space<vmem>>, vector<2x128xf32>
    %81 = arith.addf %79, %80 : vector<2x128xf32>
    %c18_61 = arith.constant 18 : index
    %c256_62 = arith.constant 256 : index
    %82 = vector.load %arg7[%c18_61, %c256_62] : memref<32x768xf32, #tpu.memory_space<vmem>>, vector<2x128xf32>
    %83 = arith.addf %81, %82 : vector<2x128xf32>
    %c20_63 = arith.constant 20 : index
    %c384_64 = arith.constant 384 : index
    %84 = vector.load %arg7[%c20_63, %c384_64] : memref<32x768xf32, #tpu.memory_space<vmem>>, vector<2x128xf32>
    %85 = arith.addf %83, %84 : vector<2x128xf32>
    %c22 = arith.constant 22 : index
    %c512_65 = arith.constant 512 : index
    %86 = vector.load %arg7[%c22, %c512_65] : memref<32x768xf32, #tpu.memory_space<vmem>>, vector<2x128xf32>
    %87 = arith.addf %85, %86 : vector<2x128xf32>
    %c24 = arith.constant 24 : index
    %c640_66 = arith.constant 640 : index
    %88 = vector.load %arg7[%c24, %c640_66] : memref<32x768xf32, #tpu.memory_space<vmem>>, vector<2x128xf32>
    %89 = arith.addf %87, %88 : vector<2x128xf32>
    %c18_67 = arith.constant 18 : index
    %c0_68 = arith.constant 0 : index
    %90 = vector.load %arg7[%c18_67, %c0_68] : memref<32x768xf32, #tpu.memory_space<vmem>>, vector<2x128xf32>
    %91 = arith.addf %22, %90 : vector<2x128xf32>
    %c20_69 = arith.constant 20 : index
    %c128_70 = arith.constant 128 : index
    %92 = vector.load %arg7[%c20_69, %c128_70] : memref<32x768xf32, #tpu.memory_space<vmem>>, vector<2x128xf32>
    %93 = arith.addf %91, %92 : vector<2x128xf32>
    %c22_71 = arith.constant 22 : index
    %c256_72 = arith.constant 256 : index
    %94 = vector.load %arg7[%c22_71, %c256_72] : memref<32x768xf32, #tpu.memory_space<vmem>>, vector<2x128xf32>
    %95 = arith.addf %93, %94 : vector<2x128xf32>
    %c24_73 = arith.constant 24 : index
    %c384_74 = arith.constant 384 : index
    %96 = vector.load %arg7[%c24_73, %c384_74] : memref<32x768xf32, #tpu.memory_space<vmem>>, vector<2x128xf32>
    %97 = arith.addf %95, %96 : vector<2x128xf32>
    %c26 = arith.constant 26 : index
    %c512_75 = arith.constant 512 : index
    %98 = vector.load %arg7[%c26, %c512_75] : memref<32x768xf32, #tpu.memory_space<vmem>>, vector<2x128xf32>
    %99 = arith.addf %97, %98 : vector<2x128xf32>
    %c28 = arith.constant 28 : index
    %c640_76 = arith.constant 640 : index
    %100 = vector.load %arg7[%c28, %c640_76] : memref<32x768xf32, #tpu.memory_space<vmem>>, vector<2x128xf32>
    %101 = arith.addf %99, %100 : vector<2x128xf32>
    %c22_77 = arith.constant 22 : index
    %c0_78 = arith.constant 0 : index
    %102 = vector.load %arg7[%c22_77, %c0_78] : memref<32x768xf32, #tpu.memory_space<vmem>>, vector<2x128xf32>
    %103 = arith.addf %22, %102 : vector<2x128xf32>
    %c24_79 = arith.constant 24 : index
    %c128_80 = arith.constant 128 : index
    %104 = vector.load %arg7[%c24_79, %c128_80] : memref<32x768xf32, #tpu.memory_space<vmem>>, vector<2x128xf32>
    %105 = arith.addf %103, %104 : vector<2x128xf32>
    %c26_81 = arith.constant 26 : index
    %c256_82 = arith.constant 256 : index
    %106 = vector.load %arg7[%c26_81, %c256_82] : memref<32x768xf32, #tpu.memory_space<vmem>>, vector<2x128xf32>
    %107 = arith.addf %105, %106 : vector<2x128xf32>
    %c28_83 = arith.constant 28 : index
    %c384_84 = arith.constant 384 : index
    %108 = vector.load %arg7[%c28_83, %c384_84] : memref<32x768xf32, #tpu.memory_space<vmem>>, vector<2x128xf32>
    %109 = arith.addf %107, %108 : vector<2x128xf32>
    %c30 = arith.constant 30 : index
    %c512_85 = arith.constant 512 : index
    %110 = vector.load %arg7[%c30, %c512_85] : memref<32x768xf32, #tpu.memory_space<vmem>>, vector<2x128xf32>
    %111 = arith.addf %109, %110 : vector<2x128xf32>
    %cst_86 = arith.constant 0.000000e+00 : f32
    %112 = vector.broadcast %cst_86 : f32 to vector<2x32xf32>
    %cst_87 = arith.constant 0.000000e+00 : f32
    %113 = vector.broadcast %cst_87 : f32 to vector<2x32xf32>
    %114 = arith.truncf %112 : vector<2x32xf32> to vector<2x32xbf16>
    %cst_88 = arith.constant dense<0.000000e+00> : vector<2x128xf32>
    %115 = tpu.matmul %114, %15, %cst_88 {dimension_numbers = #tpu.dot_dimension_numbers<[1], [0], [0], [1], [0, 0, 1, 1], [], []>} : vector<2x32xbf16>, vector<32x128xbf16>, vector<2x128xf32> -> vector<2x128xf32>
    %116 = arith.addf %115, %25 : vector<2x128xf32>
    %117 = arith.addf %41, %116 : vector<2x128xf32>
    %118 = arith.negf %117 : vector<2x128xf32>
    %119 = math.exp %118 : vector<2x128xf32>
    %cst_89 = arith.constant 1.000000e+00 : f32
    %120 = vector.broadcast %cst_89 : f32 to vector<2x128xf32>
    %121 = arith.addf %120, %119 : vector<2x128xf32>
    %122 = arith.divf %120, %121 : vector<2x128xf32>
    %123 = vector.extract_strided_slice %122 {offsets = [0, 0], sizes = [2, 32], strides = [1, 1]} : vector<2x128xf32> to vector<2x32xf32>
    %124 = vector.extract_strided_slice %122 {offsets = [0, 32], sizes = [2, 32], strides = [1, 1]} : vector<2x128xf32> to vector<2x32xf32>
    %125 = vector.extract_strided_slice %41 {offsets = [0, 64], sizes = [2, 32], strides = [1, 1]} : vector<2x128xf32> to vector<2x32xf32>
    %126 = vector.extract_strided_slice %116 {offsets = [0, 64], sizes = [2, 32], strides = [1, 1]} : vector<2x128xf32> to vector<2x32xf32>
    %127 = arith.mulf %123, %126 : vector<2x32xf32>
    %128 = arith.addf %125, %127 : vector<2x32xf32>
    %129 = math.tanh %128 : vector<2x32xf32>
    %cst_90 = arith.constant 1.000000e+00 : f32
    %130 = vector.broadcast %cst_90 : f32 to vector<2x32xf32>
    %131 = arith.subf %130, %124 : vector<2x32xf32>
    %132 = arith.mulf %131, %129 : vector<2x32xf32>
    %133 = arith.mulf %124, %112 : vector<2x32xf32>
    %134 = arith.addf %132, %133 : vector<2x32xf32>
    %135 = arith.truncf %134 : vector<2x32xf32> to vector<2x32xbf16>
    %cst_91 = arith.constant dense<0.000000e+00> : vector<2x128xf32>
    %136 = tpu.matmul %135, %17, %cst_91 {dimension_numbers = #tpu.dot_dimension_numbers<[1], [0], [0], [1], [0, 0, 1, 1], [], []>} : vector<2x32xbf16>, vector<32x128xbf16>, vector<2x128xf32> -> vector<2x128xf32>
    %137 = arith.addf %136, %28 : vector<2x128xf32>
    %138 = arith.truncf %113 : vector<2x32xf32> to vector<2x32xbf16>
    %cst_92 = arith.constant dense<0.000000e+00> : vector<2x128xf32>
    %139 = tpu.matmul %138, %19, %cst_92 {dimension_numbers = #tpu.dot_dimension_numbers<[1], [0], [0], [1], [0, 0, 1, 1], [], []>} : vector<2x32xbf16>, vector<32x128xbf16>, vector<2x128xf32> -> vector<2x128xf32>
    %140 = arith.addf %139, %31 : vector<2x128xf32>
    %141 = arith.addf %137, %140 : vector<2x128xf32>
    %142 = arith.negf %141 : vector<2x128xf32>
    %143 = math.exp %142 : vector<2x128xf32>
    %cst_93 = arith.constant 1.000000e+00 : f32
    %144 = vector.broadcast %cst_93 : f32 to vector<2x128xf32>
    %145 = arith.addf %144, %143 : vector<2x128xf32>
    %146 = arith.divf %144, %145 : vector<2x128xf32>
    %147 = vector.extract_strided_slice %146 {offsets = [0, 0], sizes = [2, 32], strides = [1, 1]} : vector<2x128xf32> to vector<2x32xf32>
    %148 = vector.extract_strided_slice %146 {offsets = [0, 32], sizes = [2, 32], strides = [1, 1]} : vector<2x128xf32> to vector<2x32xf32>
    %149 = vector.extract_strided_slice %137 {offsets = [0, 64], sizes = [2, 32], strides = [1, 1]} : vector<2x128xf32> to vector<2x32xf32>
    %150 = vector.extract_strided_slice %140 {offsets = [0, 64], sizes = [2, 32], strides = [1, 1]} : vector<2x128xf32> to vector<2x32xf32>
    %151 = arith.mulf %147, %150 : vector<2x32xf32>
    %152 = arith.addf %149, %151 : vector<2x32xf32>
    %153 = math.tanh %152 : vector<2x32xf32>
    %cst_94 = arith.constant 1.000000e+00 : f32
    %154 = vector.broadcast %cst_94 : f32 to vector<2x32xf32>
    %155 = arith.subf %154, %148 : vector<2x32xf32>
    %156 = arith.mulf %155, %153 : vector<2x32xf32>
    %157 = arith.mulf %148, %113 : vector<2x32xf32>
    %158 = arith.addf %156, %157 : vector<2x32xf32>
    %159 = arith.truncf %134 : vector<2x32xf32> to vector<2x32xbf16>
    %cst_95 = arith.constant dense<0.000000e+00> : vector<2x128xf32>
    %160 = tpu.matmul %159, %15, %cst_95 {dimension_numbers = #tpu.dot_dimension_numbers<[1], [0], [0], [1], [0, 0, 1, 1], [], []>} : vector<2x32xbf16>, vector<32x128xbf16>, vector<2x128xf32> -> vector<2x128xf32>
    %161 = arith.addf %160, %25 : vector<2x128xf32>
    %162 = arith.addf %53, %161 : vector<2x128xf32>
    %163 = arith.negf %162 : vector<2x128xf32>
    %164 = math.exp %163 : vector<2x128xf32>
    %cst_96 = arith.constant 1.000000e+00 : f32
    %165 = vector.broadcast %cst_96 : f32 to vector<2x128xf32>
    %166 = arith.addf %165, %164 : vector<2x128xf32>
    %167 = arith.divf %165, %166 : vector<2x128xf32>
    %168 = vector.extract_strided_slice %167 {offsets = [0, 0], sizes = [2, 32], strides = [1, 1]} : vector<2x128xf32> to vector<2x32xf32>
    %169 = vector.extract_strided_slice %167 {offsets = [0, 32], sizes = [2, 32], strides = [1, 1]} : vector<2x128xf32> to vector<2x32xf32>
    %170 = vector.extract_strided_slice %53 {offsets = [0, 64], sizes = [2, 32], strides = [1, 1]} : vector<2x128xf32> to vector<2x32xf32>
    %171 = vector.extract_strided_slice %161 {offsets = [0, 64], sizes = [2, 32], strides = [1, 1]} : vector<2x128xf32> to vector<2x32xf32>
    %172 = arith.mulf %168, %171 : vector<2x32xf32>
    %173 = arith.addf %170, %172 : vector<2x32xf32>
    %174 = math.tanh %173 : vector<2x32xf32>
    %cst_97 = arith.constant 1.000000e+00 : f32
    %175 = vector.broadcast %cst_97 : f32 to vector<2x32xf32>
    %176 = arith.subf %175, %169 : vector<2x32xf32>
    %177 = arith.mulf %176, %174 : vector<2x32xf32>
    %178 = arith.mulf %169, %134 : vector<2x32xf32>
    %179 = arith.addf %177, %178 : vector<2x32xf32>
    %180 = arith.truncf %179 : vector<2x32xf32> to vector<2x32xbf16>
    %cst_98 = arith.constant dense<0.000000e+00> : vector<2x128xf32>
    %181 = tpu.matmul %180, %17, %cst_98 {dimension_numbers = #tpu.dot_dimension_numbers<[1], [0], [0], [1], [0, 0, 1, 1], [], []>} : vector<2x32xbf16>, vector<32x128xbf16>, vector<2x128xf32> -> vector<2x128xf32>
    %182 = arith.addf %181, %28 : vector<2x128xf32>
    %183 = arith.truncf %158 : vector<2x32xf32> to vector<2x32xbf16>
    %cst_99 = arith.constant dense<0.000000e+00> : vector<2x128xf32>
    %184 = tpu.matmul %183, %19, %cst_99 {dimension_numbers = #tpu.dot_dimension_numbers<[1], [0], [0], [1], [0, 0, 1, 1], [], []>} : vector<2x32xbf16>, vector<32x128xbf16>, vector<2x128xf32> -> vector<2x128xf32>
    %185 = arith.addf %184, %31 : vector<2x128xf32>
    %186 = arith.addf %182, %185 : vector<2x128xf32>
    %187 = arith.negf %186 : vector<2x128xf32>
    %188 = math.exp %187 : vector<2x128xf32>
    %cst_100 = arith.constant 1.000000e+00 : f32
    %189 = vector.broadcast %cst_100 : f32 to vector<2x128xf32>
    %190 = arith.addf %189, %188 : vector<2x128xf32>
    %191 = arith.divf %189, %190 : vector<2x128xf32>
    %192 = vector.extract_strided_slice %191 {offsets = [0, 0], sizes = [2, 32], strides = [1, 1]} : vector<2x128xf32> to vector<2x32xf32>
    %193 = vector.extract_strided_slice %191 {offsets = [0, 32], sizes = [2, 32], strides = [1, 1]} : vector<2x128xf32> to vector<2x32xf32>
    %194 = vector.extract_strided_slice %182 {offsets = [0, 64], sizes = [2, 32], strides = [1, 1]} : vector<2x128xf32> to vector<2x32xf32>
    %195 = vector.extract_strided_slice %185 {offsets = [0, 64], sizes = [2, 32], strides = [1, 1]} : vector<2x128xf32> to vector<2x32xf32>
    %196 = arith.mulf %192, %195 : vector<2x32xf32>
    %197 = arith.addf %194, %196 : vector<2x32xf32>
    %198 = math.tanh %197 : vector<2x32xf32>
    %cst_101 = arith.constant 1.000000e+00 : f32
    %199 = vector.broadcast %cst_101 : f32 to vector<2x32xf32>
    %200 = arith.subf %199, %193 : vector<2x32xf32>
    %201 = arith.mulf %200, %198 : vector<2x32xf32>
    %202 = arith.mulf %193, %158 : vector<2x32xf32>
    %203 = arith.addf %201, %202 : vector<2x32xf32>
    %204 = arith.truncf %179 : vector<2x32xf32> to vector<2x32xbf16>
    %cst_102 = arith.constant dense<0.000000e+00> : vector<2x128xf32>
    %205 = tpu.matmul %204, %15, %cst_102 {dimension_numbers = #tpu.dot_dimension_numbers<[1], [0], [0], [1], [0, 0, 1, 1], [], []>} : vector<2x32xbf16>, vector<32x128xbf16>, vector<2x128xf32> -> vector<2x128xf32>
    %206 = arith.addf %205, %25 : vector<2x128xf32>
    %207 = arith.addf %65, %206 : vector<2x128xf32>
    %208 = arith.negf %207 : vector<2x128xf32>
    %209 = math.exp %208 : vector<2x128xf32>
    %cst_103 = arith.constant 1.000000e+00 : f32
    %210 = vector.broadcast %cst_103 : f32 to vector<2x128xf32>
    %211 = arith.addf %210, %209 : vector<2x128xf32>
    %212 = arith.divf %210, %211 : vector<2x128xf32>
    %213 = vector.extract_strided_slice %212 {offsets = [0, 0], sizes = [2, 32], strides = [1, 1]} : vector<2x128xf32> to vector<2x32xf32>
    %214 = vector.extract_strided_slice %212 {offsets = [0, 32], sizes = [2, 32], strides = [1, 1]} : vector<2x128xf32> to vector<2x32xf32>
    %215 = vector.extract_strided_slice %65 {offsets = [0, 64], sizes = [2, 32], strides = [1, 1]} : vector<2x128xf32> to vector<2x32xf32>
    %216 = vector.extract_strided_slice %206 {offsets = [0, 64], sizes = [2, 32], strides = [1, 1]} : vector<2x128xf32> to vector<2x32xf32>
    %217 = arith.mulf %213, %216 : vector<2x32xf32>
    %218 = arith.addf %215, %217 : vector<2x32xf32>
    %219 = math.tanh %218 : vector<2x32xf32>
    %cst_104 = arith.constant 1.000000e+00 : f32
    %220 = vector.broadcast %cst_104 : f32 to vector<2x32xf32>
    %221 = arith.subf %220, %214 : vector<2x32xf32>
    %222 = arith.mulf %221, %219 : vector<2x32xf32>
    %223 = arith.mulf %214, %179 : vector<2x32xf32>
    %224 = arith.addf %222, %223 : vector<2x32xf32>
    %225 = arith.truncf %224 : vector<2x32xf32> to vector<2x32xbf16>
    %cst_105 = arith.constant dense<0.000000e+00> : vector<2x128xf32>
    %226 = tpu.matmul %225, %17, %cst_105 {dimension_numbers = #tpu.dot_dimension_numbers<[1], [0], [0], [1], [0, 0, 1, 1], [], []>} : vector<2x32xbf16>, vector<32x128xbf16>, vector<2x128xf32> -> vector<2x128xf32>
    %227 = arith.addf %226, %28 : vector<2x128xf32>
    %228 = arith.truncf %203 : vector<2x32xf32> to vector<2x32xbf16>
    %cst_106 = arith.constant dense<0.000000e+00> : vector<2x128xf32>
    %229 = tpu.matmul %228, %19, %cst_106 {dimension_numbers = #tpu.dot_dimension_numbers<[1], [0], [0], [1], [0, 0, 1, 1], [], []>} : vector<2x32xbf16>, vector<32x128xbf16>, vector<2x128xf32> -> vector<2x128xf32>
    %230 = arith.addf %229, %31 : vector<2x128xf32>
    %231 = arith.addf %227, %230 : vector<2x128xf32>
    %232 = arith.negf %231 : vector<2x128xf32>
    %233 = math.exp %232 : vector<2x128xf32>
    %cst_107 = arith.constant 1.000000e+00 : f32
    %234 = vector.broadcast %cst_107 : f32 to vector<2x128xf32>
    %235 = arith.addf %234, %233 : vector<2x128xf32>
    %236 = arith.divf %234, %235 : vector<2x128xf32>
    %237 = vector.extract_strided_slice %236 {offsets = [0, 0], sizes = [2, 32], strides = [1, 1]} : vector<2x128xf32> to vector<2x32xf32>
    %238 = vector.extract_strided_slice %236 {offsets = [0, 32], sizes = [2, 32], strides = [1, 1]} : vector<2x128xf32> to vector<2x32xf32>
    %239 = vector.extract_strided_slice %227 {offsets = [0, 64], sizes = [2, 32], strides = [1, 1]} : vector<2x128xf32> to vector<2x32xf32>
    %240 = vector.extract_strided_slice %230 {offsets = [0, 64], sizes = [2, 32], strides = [1, 1]} : vector<2x128xf32> to vector<2x32xf32>
    %241 = arith.mulf %237, %240 : vector<2x32xf32>
    %242 = arith.addf %239, %241 : vector<2x32xf32>
    %243 = math.tanh %242 : vector<2x32xf32>
    %cst_108 = arith.constant 1.000000e+00 : f32
    %244 = vector.broadcast %cst_108 : f32 to vector<2x32xf32>
    %245 = arith.subf %244, %238 : vector<2x32xf32>
    %246 = arith.mulf %245, %243 : vector<2x32xf32>
    %247 = arith.mulf %238, %203 : vector<2x32xf32>
    %248 = arith.addf %246, %247 : vector<2x32xf32>
    %249 = arith.truncf %224 : vector<2x32xf32> to vector<2x32xbf16>
    %cst_109 = arith.constant dense<0.000000e+00> : vector<2x128xf32>
    %250 = tpu.matmul %249, %15, %cst_109 {dimension_numbers = #tpu.dot_dimension_numbers<[1], [0], [0], [1], [0, 0, 1, 1], [], []>} : vector<2x32xbf16>, vector<32x128xbf16>, vector<2x128xf32> -> vector<2x128xf32>
    %251 = arith.addf %250, %25 : vector<2x128xf32>
    %252 = arith.addf %77, %251 : vector<2x128xf32>
    %253 = arith.negf %252 : vector<2x128xf32>
    %254 = math.exp %253 : vector<2x128xf32>
    %cst_110 = arith.constant 1.000000e+00 : f32
    %255 = vector.broadcast %cst_110 : f32 to vector<2x128xf32>
    %256 = arith.addf %255, %254 : vector<2x128xf32>
    %257 = arith.divf %255, %256 : vector<2x128xf32>
    %258 = vector.extract_strided_slice %257 {offsets = [0, 0], sizes = [2, 32], strides = [1, 1]} : vector<2x128xf32> to vector<2x32xf32>
    %259 = vector.extract_strided_slice %257 {offsets = [0, 32], sizes = [2, 32], strides = [1, 1]} : vector<2x128xf32> to vector<2x32xf32>
    %260 = vector.extract_strided_slice %77 {offsets = [0, 64], sizes = [2, 32], strides = [1, 1]} : vector<2x128xf32> to vector<2x32xf32>
    %261 = vector.extract_strided_slice %251 {offsets = [0, 64], sizes = [2, 32], strides = [1, 1]} : vector<2x128xf32> to vector<2x32xf32>
    %262 = arith.mulf %258, %261 : vector<2x32xf32>
    %263 = arith.addf %260, %262 : vector<2x32xf32>
    %264 = math.tanh %263 : vector<2x32xf32>
    %cst_111 = arith.constant 1.000000e+00 : f32
    %265 = vector.broadcast %cst_111 : f32 to vector<2x32xf32>
    %266 = arith.subf %265, %259 : vector<2x32xf32>
    %267 = arith.mulf %266, %264 : vector<2x32xf32>
    %268 = arith.mulf %259, %224 : vector<2x32xf32>
    %269 = arith.addf %267, %268 : vector<2x32xf32>
    %270 = arith.truncf %269 : vector<2x32xf32> to vector<2x32xbf16>
    %cst_112 = arith.constant dense<0.000000e+00> : vector<2x128xf32>
    %271 = tpu.matmul %270, %17, %cst_112 {dimension_numbers = #tpu.dot_dimension_numbers<[1], [0], [0], [1], [0, 0, 1, 1], [], []>} : vector<2x32xbf16>, vector<32x128xbf16>, vector<2x128xf32> -> vector<2x128xf32>
    %272 = arith.addf %271, %28 : vector<2x128xf32>
    %273 = arith.truncf %248 : vector<2x32xf32> to vector<2x32xbf16>
    %cst_113 = arith.constant dense<0.000000e+00> : vector<2x128xf32>
    %274 = tpu.matmul %273, %19, %cst_113 {dimension_numbers = #tpu.dot_dimension_numbers<[1], [0], [0], [1], [0, 0, 1, 1], [], []>} : vector<2x32xbf16>, vector<32x128xbf16>, vector<2x128xf32> -> vector<2x128xf32>
    %275 = arith.addf %274, %31 : vector<2x128xf32>
    %276 = arith.addf %272, %275 : vector<2x128xf32>
    %277 = arith.negf %276 : vector<2x128xf32>
    %278 = math.exp %277 : vector<2x128xf32>
    %cst_114 = arith.constant 1.000000e+00 : f32
    %279 = vector.broadcast %cst_114 : f32 to vector<2x128xf32>
    %280 = arith.addf %279, %278 : vector<2x128xf32>
    %281 = arith.divf %279, %280 : vector<2x128xf32>
    %282 = vector.extract_strided_slice %281 {offsets = [0, 0], sizes = [2, 32], strides = [1, 1]} : vector<2x128xf32> to vector<2x32xf32>
    %283 = vector.extract_strided_slice %281 {offsets = [0, 32], sizes = [2, 32], strides = [1, 1]} : vector<2x128xf32> to vector<2x32xf32>
    %284 = vector.extract_strided_slice %272 {offsets = [0, 64], sizes = [2, 32], strides = [1, 1]} : vector<2x128xf32> to vector<2x32xf32>
    %285 = vector.extract_strided_slice %275 {offsets = [0, 64], sizes = [2, 32], strides = [1, 1]} : vector<2x128xf32> to vector<2x32xf32>
    %286 = arith.mulf %282, %285 : vector<2x32xf32>
    %287 = arith.addf %284, %286 : vector<2x32xf32>
    %288 = math.tanh %287 : vector<2x32xf32>
    %cst_115 = arith.constant 1.000000e+00 : f32
    %289 = vector.broadcast %cst_115 : f32 to vector<2x32xf32>
    %290 = arith.subf %289, %283 : vector<2x32xf32>
    %291 = arith.mulf %290, %288 : vector<2x32xf32>
    %292 = arith.mulf %283, %248 : vector<2x32xf32>
    %293 = arith.addf %291, %292 : vector<2x32xf32>
    %294 = arith.truncf %269 : vector<2x32xf32> to vector<2x32xbf16>
    %cst_116 = arith.constant dense<0.000000e+00> : vector<2x128xf32>
    %295 = tpu.matmul %294, %15, %cst_116 {dimension_numbers = #tpu.dot_dimension_numbers<[1], [0], [0], [1], [0, 0, 1, 1], [], []>} : vector<2x32xbf16>, vector<32x128xbf16>, vector<2x128xf32> -> vector<2x128xf32>
    %296 = arith.addf %295, %25 : vector<2x128xf32>
    %297 = arith.addf %89, %296 : vector<2x128xf32>
    %298 = arith.negf %297 : vector<2x128xf32>
    %299 = math.exp %298 : vector<2x128xf32>
    %cst_117 = arith.constant 1.000000e+00 : f32
    %300 = vector.broadcast %cst_117 : f32 to vector<2x128xf32>
    %301 = arith.addf %300, %299 : vector<2x128xf32>
    %302 = arith.divf %300, %301 : vector<2x128xf32>
    %303 = vector.extract_strided_slice %302 {offsets = [0, 0], sizes = [2, 32], strides = [1, 1]} : vector<2x128xf32> to vector<2x32xf32>
    %304 = vector.extract_strided_slice %302 {offsets = [0, 32], sizes = [2, 32], strides = [1, 1]} : vector<2x128xf32> to vector<2x32xf32>
    %305 = vector.extract_strided_slice %89 {offsets = [0, 64], sizes = [2, 32], strides = [1, 1]} : vector<2x128xf32> to vector<2x32xf32>
    %306 = vector.extract_strided_slice %296 {offsets = [0, 64], sizes = [2, 32], strides = [1, 1]} : vector<2x128xf32> to vector<2x32xf32>
    %307 = arith.mulf %303, %306 : vector<2x32xf32>
    %308 = arith.addf %305, %307 : vector<2x32xf32>
    %309 = math.tanh %308 : vector<2x32xf32>
    %cst_118 = arith.constant 1.000000e+00 : f32
    %310 = vector.broadcast %cst_118 : f32 to vector<2x32xf32>
    %311 = arith.subf %310, %304 : vector<2x32xf32>
    %312 = arith.mulf %311, %309 : vector<2x32xf32>
    %313 = arith.mulf %304, %269 : vector<2x32xf32>
    %314 = arith.addf %312, %313 : vector<2x32xf32>
    %315 = arith.truncf %314 : vector<2x32xf32> to vector<2x32xbf16>
    %cst_119 = arith.constant dense<0.000000e+00> : vector<2x128xf32>
    %316 = tpu.matmul %315, %17, %cst_119 {dimension_numbers = #tpu.dot_dimension_numbers<[1], [0], [0], [1], [0, 0, 1, 1], [], []>} : vector<2x32xbf16>, vector<32x128xbf16>, vector<2x128xf32> -> vector<2x128xf32>
    %317 = arith.addf %316, %28 : vector<2x128xf32>
    %318 = arith.truncf %293 : vector<2x32xf32> to vector<2x32xbf16>
    %cst_120 = arith.constant dense<0.000000e+00> : vector<2x128xf32>
    %319 = tpu.matmul %318, %19, %cst_120 {dimension_numbers = #tpu.dot_dimension_numbers<[1], [0], [0], [1], [0, 0, 1, 1], [], []>} : vector<2x32xbf16>, vector<32x128xbf16>, vector<2x128xf32> -> vector<2x128xf32>
    %320 = arith.addf %319, %31 : vector<2x128xf32>
    %321 = arith.addf %317, %320 : vector<2x128xf32>
    %322 = arith.negf %321 : vector<2x128xf32>
    %323 = math.exp %322 : vector<2x128xf32>
    %cst_121 = arith.constant 1.000000e+00 : f32
    %324 = vector.broadcast %cst_121 : f32 to vector<2x128xf32>
    %325 = arith.addf %324, %323 : vector<2x128xf32>
    %326 = arith.divf %324, %325 : vector<2x128xf32>
    %327 = vector.extract_strided_slice %326 {offsets = [0, 0], sizes = [2, 32], strides = [1, 1]} : vector<2x128xf32> to vector<2x32xf32>
    %328 = vector.extract_strided_slice %326 {offsets = [0, 32], sizes = [2, 32], strides = [1, 1]} : vector<2x128xf32> to vector<2x32xf32>
    %329 = vector.extract_strided_slice %317 {offsets = [0, 64], sizes = [2, 32], strides = [1, 1]} : vector<2x128xf32> to vector<2x32xf32>
    %330 = vector.extract_strided_slice %320 {offsets = [0, 64], sizes = [2, 32], strides = [1, 1]} : vector<2x128xf32> to vector<2x32xf32>
    %331 = arith.mulf %327, %330 : vector<2x32xf32>
    %332 = arith.addf %329, %331 : vector<2x32xf32>
    %333 = math.tanh %332 : vector<2x32xf32>
    %cst_122 = arith.constant 1.000000e+00 : f32
    %334 = vector.broadcast %cst_122 : f32 to vector<2x32xf32>
    %335 = arith.subf %334, %328 : vector<2x32xf32>
    %336 = arith.mulf %335, %333 : vector<2x32xf32>
    %337 = arith.mulf %328, %293 : vector<2x32xf32>
    %338 = arith.addf %336, %337 : vector<2x32xf32>
    %339 = arith.truncf %314 : vector<2x32xf32> to vector<2x32xbf16>
    %cst_123 = arith.constant dense<0.000000e+00> : vector<2x128xf32>
    %340 = tpu.matmul %339, %15, %cst_123 {dimension_numbers = #tpu.dot_dimension_numbers<[1], [0], [0], [1], [0, 0, 1, 1], [], []>} : vector<2x32xbf16>, vector<32x128xbf16>, vector<2x128xf32> -> vector<2x128xf32>
    %341 = arith.addf %340, %25 : vector<2x128xf32>
    %342 = arith.addf %101, %341 : vector<2x128xf32>
    %343 = arith.negf %342 : vector<2x128xf32>
    %344 = math.exp %343 : vector<2x128xf32>
    %cst_124 = arith.constant 1.000000e+00 : f32
    %345 = vector.broadcast %cst_124 : f32 to vector<2x128xf32>
    %346 = arith.addf %345, %344 : vector<2x128xf32>
    %347 = arith.divf %345, %346 : vector<2x128xf32>
    %348 = vector.extract_strided_slice %347 {offsets = [0, 0], sizes = [2, 32], strides = [1, 1]} : vector<2x128xf32> to vector<2x32xf32>
    %349 = vector.extract_strided_slice %347 {offsets = [0, 32], sizes = [2, 32], strides = [1, 1]} : vector<2x128xf32> to vector<2x32xf32>
    %350 = vector.extract_strided_slice %101 {offsets = [0, 64], sizes = [2, 32], strides = [1, 1]} : vector<2x128xf32> to vector<2x32xf32>
    %351 = vector.extract_strided_slice %341 {offsets = [0, 64], sizes = [2, 32], strides = [1, 1]} : vector<2x128xf32> to vector<2x32xf32>
    %352 = arith.mulf %348, %351 : vector<2x32xf32>
    %353 = arith.addf %350, %352 : vector<2x32xf32>
    %354 = math.tanh %353 : vector<2x32xf32>
    %cst_125 = arith.constant 1.000000e+00 : f32
    %355 = vector.broadcast %cst_125 : f32 to vector<2x32xf32>
    %356 = arith.subf %355, %349 : vector<2x32xf32>
    %357 = arith.mulf %356, %354 : vector<2x32xf32>
    %358 = arith.mulf %349, %314 : vector<2x32xf32>
    %359 = arith.addf %357, %358 : vector<2x32xf32>
    %360 = arith.truncf %359 : vector<2x32xf32> to vector<2x32xbf16>
    %cst_126 = arith.constant dense<0.000000e+00> : vector<2x128xf32>
    %361 = tpu.matmul %360, %17, %cst_126 {dimension_numbers = #tpu.dot_dimension_numbers<[1], [0], [0], [1], [0, 0, 1, 1], [], []>} : vector<2x32xbf16>, vector<32x128xbf16>, vector<2x128xf32> -> vector<2x128xf32>
    %362 = arith.addf %361, %28 : vector<2x128xf32>
    %363 = arith.truncf %338 : vector<2x32xf32> to vector<2x32xbf16>
    %cst_127 = arith.constant dense<0.000000e+00> : vector<2x128xf32>
    %364 = tpu.matmul %363, %19, %cst_127 {dimension_numbers = #tpu.dot_dimension_numbers<[1], [0], [0], [1], [0, 0, 1, 1], [], []>} : vector<2x32xbf16>, vector<32x128xbf16>, vector<2x128xf32> -> vector<2x128xf32>
    %365 = arith.addf %364, %31 : vector<2x128xf32>
    %366 = arith.addf %362, %365 : vector<2x128xf32>
    %367 = arith.negf %366 : vector<2x128xf32>
    %368 = math.exp %367 : vector<2x128xf32>
    %cst_128 = arith.constant 1.000000e+00 : f32
    %369 = vector.broadcast %cst_128 : f32 to vector<2x128xf32>
    %370 = arith.addf %369, %368 : vector<2x128xf32>
    %371 = arith.divf %369, %370 : vector<2x128xf32>
    %372 = vector.extract_strided_slice %371 {offsets = [0, 0], sizes = [2, 32], strides = [1, 1]} : vector<2x128xf32> to vector<2x32xf32>
    %373 = vector.extract_strided_slice %371 {offsets = [0, 32], sizes = [2, 32], strides = [1, 1]} : vector<2x128xf32> to vector<2x32xf32>
    %374 = vector.extract_strided_slice %362 {offsets = [0, 64], sizes = [2, 32], strides = [1, 1]} : vector<2x128xf32> to vector<2x32xf32>
    %375 = vector.extract_strided_slice %365 {offsets = [0, 64], sizes = [2, 32], strides = [1, 1]} : vector<2x128xf32> to vector<2x32xf32>
    %376 = arith.mulf %372, %375 : vector<2x32xf32>
    %377 = arith.addf %374, %376 : vector<2x32xf32>
    %378 = math.tanh %377 : vector<2x32xf32>
    %cst_129 = arith.constant 1.000000e+00 : f32
    %379 = vector.broadcast %cst_129 : f32 to vector<2x32xf32>
    %380 = arith.subf %379, %373 : vector<2x32xf32>
    %381 = arith.mulf %380, %378 : vector<2x32xf32>
    %382 = arith.mulf %373, %338 : vector<2x32xf32>
    %383 = arith.addf %381, %382 : vector<2x32xf32>
    %384 = arith.truncf %359 : vector<2x32xf32> to vector<2x32xbf16>
    %cst_130 = arith.constant dense<0.000000e+00> : vector<2x128xf32>
    %385 = tpu.matmul %384, %15, %cst_130 {dimension_numbers = #tpu.dot_dimension_numbers<[1], [0], [0], [1], [0, 0, 1, 1], [], []>} : vector<2x32xbf16>, vector<32x128xbf16>, vector<2x128xf32> -> vector<2x128xf32>
    %386 = arith.addf %385, %25 : vector<2x128xf32>
    %387 = arith.addf %111, %386 : vector<2x128xf32>
    %388 = arith.negf %387 : vector<2x128xf32>
    %389 = math.exp %388 : vector<2x128xf32>
    %cst_131 = arith.constant 1.000000e+00 : f32
    %390 = vector.broadcast %cst_131 : f32 to vector<2x128xf32>
    %391 = arith.addf %390, %389 : vector<2x128xf32>
    %392 = arith.divf %390, %391 : vector<2x128xf32>
    %393 = vector.extract_strided_slice %392 {offsets = [0, 0], sizes = [2, 32], strides = [1, 1]} : vector<2x128xf32> to vector<2x32xf32>
    %394 = vector.extract_strided_slice %392 {offsets = [0, 32], sizes = [2, 32], strides = [1, 1]} : vector<2x128xf32> to vector<2x32xf32>
    %395 = vector.extract_strided_slice %111 {offsets = [0, 64], sizes = [2, 32], strides = [1, 1]} : vector<2x128xf32> to vector<2x32xf32>
    %396 = vector.extract_strided_slice %386 {offsets = [0, 64], sizes = [2, 32], strides = [1, 1]} : vector<2x128xf32> to vector<2x32xf32>
    %397 = arith.mulf %393, %396 : vector<2x32xf32>
    %398 = arith.addf %395, %397 : vector<2x32xf32>
    %399 = math.tanh %398 : vector<2x32xf32>
    %cst_132 = arith.constant 1.000000e+00 : f32
    %400 = vector.broadcast %cst_132 : f32 to vector<2x32xf32>
    %401 = arith.subf %400, %394 : vector<2x32xf32>
    %402 = arith.mulf %401, %399 : vector<2x32xf32>
    %403 = arith.mulf %394, %359 : vector<2x32xf32>
    %404 = arith.addf %402, %403 : vector<2x32xf32>
    %405 = arith.truncf %404 : vector<2x32xf32> to vector<2x32xbf16>
    %cst_133 = arith.constant dense<0.000000e+00> : vector<2x128xf32>
    %406 = tpu.matmul %405, %17, %cst_133 {dimension_numbers = #tpu.dot_dimension_numbers<[1], [0], [0], [1], [0, 0, 1, 1], [], []>} : vector<2x32xbf16>, vector<32x128xbf16>, vector<2x128xf32> -> vector<2x128xf32>
    %407 = arith.addf %406, %28 : vector<2x128xf32>
    %408 = arith.truncf %383 : vector<2x32xf32> to vector<2x32xbf16>
    %cst_134 = arith.constant dense<0.000000e+00> : vector<2x128xf32>
    %409 = tpu.matmul %408, %19, %cst_134 {dimension_numbers = #tpu.dot_dimension_numbers<[1], [0], [0], [1], [0, 0, 1, 1], [], []>} : vector<2x32xbf16>, vector<32x128xbf16>, vector<2x128xf32> -> vector<2x128xf32>
    %410 = arith.addf %409, %31 : vector<2x128xf32>
    %411 = arith.addf %407, %410 : vector<2x128xf32>
    %412 = arith.negf %411 : vector<2x128xf32>
    %413 = math.exp %412 : vector<2x128xf32>
    %cst_135 = arith.constant 1.000000e+00 : f32
    %414 = vector.broadcast %cst_135 : f32 to vector<2x128xf32>
    %415 = arith.addf %414, %413 : vector<2x128xf32>
    %416 = arith.divf %414, %415 : vector<2x128xf32>
    %417 = vector.extract_strided_slice %416 {offsets = [0, 0], sizes = [2, 32], strides = [1, 1]} : vector<2x128xf32> to vector<2x32xf32>
    %418 = vector.extract_strided_slice %416 {offsets = [0, 32], sizes = [2, 32], strides = [1, 1]} : vector<2x128xf32> to vector<2x32xf32>
    %419 = vector.extract_strided_slice %407 {offsets = [0, 64], sizes = [2, 32], strides = [1, 1]} : vector<2x128xf32> to vector<2x32xf32>
    %420 = vector.extract_strided_slice %410 {offsets = [0, 64], sizes = [2, 32], strides = [1, 1]} : vector<2x128xf32> to vector<2x32xf32>
    %421 = arith.mulf %417, %420 : vector<2x32xf32>
    %422 = arith.addf %419, %421 : vector<2x32xf32>
    %423 = math.tanh %422 : vector<2x32xf32>
    %cst_136 = arith.constant 1.000000e+00 : f32
    %424 = vector.broadcast %cst_136 : f32 to vector<2x32xf32>
    %425 = arith.subf %424, %418 : vector<2x32xf32>
    %426 = arith.mulf %425, %423 : vector<2x32xf32>
    %427 = arith.mulf %418, %383 : vector<2x32xf32>
    %428 = arith.addf %426, %427 : vector<2x32xf32>
    %429 = tpu.concatenate %158, %203, %248, %293, %338, %383, %428 in 0 : vector<2x32xf32>, vector<2x32xf32>, vector<2x32xf32>, vector<2x32xf32>, vector<2x32xf32>, vector<2x32xf32>, vector<2x32xf32> -> vector<14x32xf32>
    %c0_137 = arith.constant 0 : index
    %c0_138 = arith.constant 0 : index
    %430 = vector.load %arg6[%c0_137, %c0_138] : memref<14x32xf32, #tpu.memory_space<vmem>>, vector<14x32xf32>
    tpu.vector_store %arg6[%c0_137, %c0_138], %429 {strides = array<i32>} : memref<14x32xf32, #tpu.memory_space<vmem>>, vector<14x32xf32>,
    return
  }
  func.func @transform_0(%arg0: i32) -> (i32, i32) {
    %c0_i32 = arith.constant 0 : i32
    %c0_i32_0 = arith.constant 0 : i32
    %c0_i32_1 = arith.constant 0 : i32
    return %c0_i32, %c0_i32_0 : i32, i32
  }
  func.func @transform_1(%arg0: i32) -> (i32, i32) {
    %c0_i32 = arith.constant 0 : i32
    %c0_i32_0 = arith.constant 0 : i32
    %c0_i32_1 = arith.constant 0 : i32
    return %c0_i32, %c0_i32_0 : i32, i32
  }
  func.func @transform_2(%arg0: i32) -> (i32, i32) {
    %c0_i32 = arith.constant 0 : i32
    %c0_i32_0 = arith.constant 0 : i32
    %c0_i32_1 = arith.constant 0 : i32
    return %c0_i32, %c0_i32_0 : i32, i32
  }
  func.func @transform_3(%arg0: i32) -> (i32, i32, i32) {
    %c0_i32 = arith.constant 0 : i32
    %c0_i32_0 = arith.constant 0 : i32
    %c0_i32_1 = arith.constant 0 : i32
    %c0_i32_2 = arith.constant 0 : i32
    return %c0_i32, %c0_i32_0, %c0_i32_1 : i32, i32, i32
  }
  func.func @transform_4(%arg0: i32) -> (i32, i32) {
    %c0_i32 = arith.constant 0 : i32
    %c0_i32_0 = arith.constant 0 : i32
    %c0_i32_1 = arith.constant 0 : i32
    return %c0_i32, %c0_i32_0 : i32, i32
  }
  func.func @transform_5(%arg0: i32) -> (i32, i32) {
    %c0_i32 = arith.constant 0 : i32
    %c0_i32_0 = arith.constant 0 : i32
    %c0_i32_1 = arith.constant 0 : i32
    return %c0_i32, %c0_i32_0 : i32, i32
  }
}

</mosaic_0001>

<llo_original>
// kernel: bgru_forward.1
$region0: #{bgru_forward.1}
  #allocation0 [shape = 'u32[]', space=smem, size = 0x4, offset = 0x4, fixed_abs, tag = 'smem constant byte address 0x4 - core index']
  #allocation1 [shape = 'u32[144,128]{1,0:T(1,128)}', space=vmem, size = 0x12000, scoped, tag = 'internal scratch']
  #allocation2 [shape = 'f32[32,768]{1,0:T(8,128)}', space=vmem, size = 0x18000, scoped, tag = 'scratch operand']
  %s0 = inlined_call_operand.vmem [shape: f32[32,8], index: 0, kind: input, shape index: {}]
  %s1 = inlined_call_operand.vmem [shape: f32[9,8], index: 1, kind: input, shape index: {}]
  %s2 = inlined_call_operand.vmem [shape: bf16[8,768], index: 2, kind: input, shape index: {}]
  %s3 = inlined_call_operand.vmem [shape: bf16[3,32,128], index: 3, kind: input, shape index: {}]
  %s4 = inlined_call_operand.vmem [shape: f32[4,128], index: 4, kind: input, shape index: {}]
  %s5 = inlined_call_operand.vmem [shape: f32[14,32], index: 5, kind: output, shape index: {}]
  %s6 = sld [smem:[#allocation0]]
  $region30: #{bgru_forward.1} parent=0
    _
  %s8 = ssub.s32 1, %s6
  %s9 = scalar_select 0, %s8, %s6
  // Predicated region
  $region2: #{bgru_forward.1} parent=0 // pred_check
    _
  $region3: #{bgru_forward.1} parent=0 // pred_check_branch
    %11 = sbr.rel (0) target = $region5
  $region4: #{bgru_forward.1} parent=0 // pred_region
    _
  $region5: #{bgru_forward.1} parent=0 // pred_fallthru
    _
  // Predicated region
  $region6: #{bgru_forward.1} parent=0 // pred_check
    _
  $region7: #{bgru_forward.1} parent=0 // pred_check_branch
    %13 = sbr.rel (0) target = $region9
  $region8: #{bgru_forward.1} parent=0 // pred_region
    _
  $region9: #{bgru_forward.1} parent=0 // pred_fallthru
    _
  // Predicated region
  $region10: #{bgru_forward.1} parent=0 // pred_check
    _
  $region11: #{bgru_forward.1} parent=0 // pred_check_branch
    %15 = sbr.rel (0) target = $region13
  $region12: #{bgru_forward.1} parent=0 // pred_region
    _
  $region13: #{bgru_forward.1} parent=0 // pred_fallthru
    _
  // Predicated region
  $region14: #{bgru_forward.1} parent=0 // pred_check
    _
  $region15: #{bgru_forward.1} parent=0 // pred_check_branch
    %17 = sbr.rel (0) target = $region17
  $region16: #{bgru_forward.1} parent=0 // pred_region
    _
  $region17: #{bgru_forward.1} parent=0 // pred_fallthru
    _
  // Predicated region
  $region18: #{bgru_forward.1} parent=0 // pred_check
    _
  $region19: #{bgru_forward.1} parent=0 // pred_check_branch
    %19 = sbr.rel (0) target = $region21
  $region20: #{bgru_forward.1} parent=0 // pred_region
    _
  $region21: #{bgru_forward.1} parent=0 // pred_fallthru
    _
  %v21 = vld [vmem:[%s0] sm:$0xff]
  %v22 = vld [vmem:[%s0 + $0x8] sm:$0xff]
  %v23 = vld [vmem:[%s0 + $0x10] sm:$0xff]
  %v24 = vld [vmem:[%s0 + $0x18] sm:$0xff]
  %v25 = vld [vmem:[%s1] sm:$0xff]
  %v26 = vld [vmem:[%s1 + $0x8] sm:$0x1]
  %v27 = vlaneseq
  %v28 = vshrl.u32 %v27, 7
  %v29 = vsub.s32 0, %v28
  %v30 = vrot.slane %v26, %v29
  %vm31 = vcmask 64512
  %v33 = vsel %vm31, %v21, 0
  %v36 = vsel %vm31, %v22, 0
  %v39 = vsel %vm31, %v23, 0
  %v42 = vsel %vm31, %v24, 0
  %44 = vmatprep.subr.mxu0 0.0
  %45 = vmatpush1.msra.mxu0 %v25
  %46 = vmatprep.subr.mxu0 0.0
  %47 = vmatpush1.msra.mxu0 0.0
  %48 = vmatprep.subr.mxu0 0.0
  %49 = vmatpush1.msra.mxu0 0.0
  %50 = vmatprep.subr.mxu0 0.0
  %51 = vmatpush1.msra.mxu0 0.0
  %52 = vmatprep.subr.mxu0 0.0
  %53 = vmatpush1.msra.mxu0 0.0
  %54 = vmatprep.subr.mxu0 0.0
  %55 = vmatpush1.msra.mxu0 0.0
  %56 = vmatprep.subr.mxu0 0.0
  %57 = vmatpush1.msra.mxu0 0.0
  %58 = vmatprep.subr.mxu0 0.0
  %59 = vmatpush1.msra.mxu0 0.0
  %60 = vmatprep.subr.mxu0 0.0
  %61 = vmatpush1.msra.mxu0 0.0
  %62 = vmatprep.subr.mxu0 0.0
  %63 = vmatpush1.msra.mxu0 0.0
  %64 = vmatprep.subr.mxu0 0.0
  %65 = vmatpush1.msra.mxu0 0.0
  %66 = vmatprep.subr.mxu0 0.0
  %67 = vmatpush1.msra.mxu0 0.0
  %68 = vmatprep.subr.mxu0 0.0
  %69 = vmatpush1.msra.mxu0 0.0
  %70 = vmatprep.subr.mxu0 0.0
  %71 = vmatpush1.msra.mxu0 0.0
  %72 = vmatprep.subr.mxu0 0.0
  %73 = vmatpush1.msra.mxu0 0.0
  %74 = vmatprep.subr.mxu0 0.0
  %75 = vmatpush1.msra.mxu0 0.0
  %76 = vmatprep.subr.mxu0 0.0
  %77 = vmatpush1.msra.mxu0 0.0
  %78 = vmatprep.subr.mxu0 0.0
  %79 = vmatpush1.msra.mxu0 0.0
  %80 = vmatprep.subr.mxu0 0.0
  %81 = vmatpush1.msra.mxu0 0.0
  %82 = vmatprep.subr.mxu0 0.0
  %83 = vmatpush1.msra.mxu0 0.0
  %84 = vmatprep.subr.mxu0 0.0
  %85 = vmatpush1.msra.mxu0 0.0
  %86 = vmatprep.subr.mxu0 0.0
  %87 = vmatpush1.msra.mxu0 0.0
  %88 = vmatprep.subr.mxu0 0.0
  %89 = vmatpush1.msra.mxu0 0.0
  %90 = vmatprep.subr.mxu0 0.0
  %91 = vmatpush1.msra.mxu0 0.0
  %92 = vmatprep.subr.mxu0 0.0
  %93 = vmatpush1.msra.mxu0 0.0
  %94 = vmatprep.subr.mxu0 0.0
  %95 = vmatpush1.msra.mxu0 0.0
  %96 = vmatprep.subr.mxu0 0.0
  %97 = vmatpush1.msra.mxu0 0.0
  %98 = vmatprep.subr.mxu0 0.0
  %99 = vmatpush1.msra.mxu0 0.0
  %100 = vmatprep.subr.mxu0 0.0
  %101 = vmatpush1.msra.mxu0 0.0
  %102 = vmatprep.subr.mxu0 0.0
  %103 = vmatpush1.msra.mxu0 0.0
  %104 = vmatprep.subr.mxu0 0.0
  %105 = vmatpush1.msra.mxu0 0.0
  %106 = vmatprep.subr.mxu0 0.0
  %107 = vmatpush1.msra.mxu0 0.0
  %108 = vmatprep.mubr.f32.mxu0 0.0
  %109 = vmatmul.mubr.f32.gmra.mrb[0].mxu0 %v33
  %v110 = vpop.f32.mrb[0].mxu0
  %v111 = vadd.f32 %v30, %v110
  %v112 = vpop.f32.mrb[0].mxu0
  %113 = vmatprep.mubr.f32.mxu0 0.0
  %114 = vmatmul.mubr.f32.gmra.mrb[0].mxu0 %v36
  %v115 = vpop.f32.mrb[0].mxu0
  %v116 = vadd.f32 %v30, %v115
  %v117 = vpop.f32.mrb[0].mxu0
  %118 = vmatprep.mubr.f32.mxu0 0.0
  %119 = vmatmul.mubr.f32.gmra.mrb[0].mxu0 %v39
  %v120 = vpop.f32.mrb[0].mxu0
  %v121 = vadd.f32 %v30, %v120
  %v122 = vpop.f32.mrb[0].mxu0
  %123 = vmatprep.mubr.f32.mxu0 0.0
  %124 = vmatmul.mubr.f32.gmra.mrb[0].mxu0 %v42
  %v125 = vpop.f32.mrb[0].mxu0
  %v126 = vadd.f32 %v30, %v125
  %v127 = vpop.f32.mrb[0].mxu0
  %128 = vdwg.mxu0
  %v129 = vand.u32 2147483647, %v111
  %v130 = vand.u32 2147483647, %v116
  %v131 = vand.u32 2147483647, %v121
  %v132 = vand.u32 2147483647, %v126
  %v133 = vadd.f32 %v129, 1.0
  %v134 = vadd.f32 %v130, 1.0
  %v135 = vadd.f32 %v131, 1.0
  %v136 = vadd.f32 %v132, 1.0
  %v137 = vrcp.pop %v133
  %v138 = vmul.f32 %v111, %v137
  %v139 = vrcp.pop %v134
  %v140 = vmul.f32 %v116, %v139
  %v141 = vrcp.pop %v135
  %v142 = vmul.f32 %v121, %v141
  %v143 = vrcp.pop %v136
  %v144 = vmul.f32 %v126, %v143
  %v145 = vpack.c.bf16 %v140, %v138
  %v146 = vpack.c.bf16 %v144, %v142
  %v147 = vld [vmem:[%s2] sm:$0xff]
  %v148 = vld [vmem:[%s2 + $0x8] sm:$0xff]
  %v149 = vld [vmem:[%s2 + $0x10] sm:$0xff]
  %v153 = vunpack.c.l.b16 %v147
  %v154 = vunpack.c.h.b16 %v147
  %v155 = vunpack.c.l.b16 %v148
  %v156 = vunpack.c.h.b16 %v148
  %v157 = vunpack.c.l.b16 %v149
  %v158 = vunpack.c.h.b16 %v149
  %v159 = vpack.c.b16 %v153, %v153
  %v160 = vpack.c.b16 %v154, %v154
  %v161 = vpack.c.b16 %v155, %v155
  %v162 = vpack.c.b16 %v156, %v156
  %v163 = vpack.c.b16 %v157, %v157
  %v164 = vpack.c.b16 %v158, %v158
  %v166 = vsel %vm31, %v145, 0
  %v169 = vsel %vm31, %v146, 0
  %vm171 = vcmask 1043456
  %v173 = vsel %vm171, %v159, 0
  %v176 = vsel %vm171, %v160, 0
  %v179 = vsel %vm171, %v161, 0
  %v182 = vsel %vm171, %v162, 0
  %v185 = vsel %vm171, %v163, 0
  %v188 = vsel %vm171, %v164, 0
  %190 = vmatprep.subr.bf16.mxu0 %v176
  %191 = vmatpush1.bf16.msra.mxu0 %v173
  %192 = vmatprep.subr.bf16.mxu0 0
  %193 = vmatpush1.bf16.msra.mxu0 0
  %194 = vmatprep.subr.bf16.mxu0 0
  %195 = vmatpush1.bf16.msra.mxu0 0
  %196 = vmatprep.subr.bf16.mxu0 0
  %197 = vmatpush1.bf16.msra.mxu0 0
  %198 = vmatprep.subr.bf16.mxu0 0
  %199 = vmatpush1.bf16.msra.mxu0 0
  %200 = vmatprep.subr.bf16.mxu0 0
  %201 = vmatpush1.bf16.msra.mxu0 0
  %202 = vmatprep.subr.bf16.mxu0 0
  %203 = vmatpush1.bf16.msra.mxu0 0
  %204 = vmatprep.subr.bf16.mxu0 0
  %205 = vmatpush1.bf16.msra.mxu0 0
  %206 = vmatprep.subr.bf16.mxu0 0
  %207 = vmatpush1.bf16.msra.mxu0 0
  %208 = vmatprep.subr.bf16.mxu0 0
  %209 = vmatpush1.bf16.msra.mxu0 0
  %210 = vmatprep.subr.bf16.mxu0 0
  %211 = vmatpush1.bf16.msra.mxu0 0
  %212 = vmatprep.subr.bf16.mxu0 0
  %213 = vmatpush1.bf16.msra.mxu0 0
  %214 = vmatprep.subr.bf16.mxu0 0
  %215 = vmatpush1.bf16.msra.mxu0 0
  %216 = vmatprep.subr.bf16.mxu0 0
  %217 = vmatpush1.bf16.msra.mxu0 0
  %218 = vmatprep.subr.bf16.mxu0 0
  %219 = vmatpush1.bf16.msra.mxu0 0
  %220 = vmatprep.subr.bf16.mxu0 0
  %221 = vmatpush1.bf16.msra.mxu0 0
  %222 = vmatprep.mubr.bf16.mxu0 0
  %223 = vmatmul.mubr.bf16.gmra.mrb[0].mxu0 %v166
  %v224 = vpop.f32.mrb[0].mxu0
  %v225 = vadd.f32 0.0, %v224
  %v226 = vpop.f32.mrb[0].mxu0
  %v227 = vadd.f32 0.0, %v226
  %v228 = vpop.f32.mrb[0].mxu0
  %v229 = vadd.f32 0.0, %v228
  %v230 = vpop.f32.mrb[0].mxu0
  %v231 = vadd.f32 0.0, %v230
  %232 = vmatprep.mubr.bf16.mxu0 0
  %233 = vmatmul.mubr.bf16.gmra.mrb[0].mxu0 %v169
  %v234 = vpop.f32.mrb[0].mxu0
  %v235 = vadd.f32 0.0, %v234
  %v236 = vpop.f32.mrb[0].mxu0
  %v237 = vadd.f32 0.0, %v236
  %v238 = vpop.f32.mrb[0].mxu0
  %v239 = vadd.f32 0.0, %v238
  %v240 = vpop.f32.mrb[0].mxu0
  %v241 = vadd.f32 0.0, %v240
  %242 = vdwg.mxu0
  %243 = vmatprep.subr.bf16.mxu0 %v182
  %244 = vmatpush1.bf16.msra.mxu0 %v179
  %245 = vmatprep.subr.bf16.mxu0 0
  %246 = vmatpush1.bf16.msra.mxu0 0
  %247 = vmatprep.subr.bf16.mxu0 0
  %248 = vmatpush1.bf16.msra.mxu0 0
  %249 = vmatprep.subr.bf16.mxu0 0
  %250 = vmatpush1.bf16.msra.mxu0 0
  %251 = vmatprep.subr.bf16.mxu0 0
  %252 = vmatpush1.bf16.msra.mxu0 0
  %253 = vmatprep.subr.bf16.mxu0 0
  %254 = vmatpush1.bf16.msra.mxu0 0
  %255 = vmatprep.subr.bf16.mxu0 0
  %256 = vmatpush1.bf16.msra.mxu0 0
  %257 = vmatprep.subr.bf16.mxu0 0
  %258 = vmatpush1.bf16.msra.mxu0 0
  %259 = vmatprep.subr.bf16.mxu0 0
  %260 = vmatpush1.bf16.msra.mxu0 0
  %261 = vmatprep.subr.bf16.mxu0 0
  %262 = vmatpush1.bf16.msra.mxu0 0
  %263 = vmatprep.subr.bf16.mxu0 0
  %264 = vmatpush1.bf16.msra.mxu0 0
  %265 = vmatprep.subr.bf16.mxu0 0
  %266 = vmatpush1.bf16.msra.mxu0 0
  %267 = vmatprep.subr.bf16.mxu0 0
  %268 = vmatpush1.bf16.msra.mxu0 0
  %269 = vmatprep.subr.bf16.mxu0 0
  %270 = vmatpush1.bf16.msra.mxu0 0
  %271 = vmatprep.subr.bf16.mxu0 0
  %272 = vmatpush1.bf16.msra.mxu0 0
  %273 = vmatprep.subr.bf16.mxu0 0
  %274 = vmatpush1.bf16.msra.mxu0 0
  %275 = vmatprep.mubr.bf16.mxu0 0
  %276 = vmatmul.mubr.bf16.gmra.mrb[0].mxu0 %v166
  %v277 = vpop.f32.mrb[0].mxu0
  %v278 = vadd.f32 0.0, %v277
  %v279 = vpop.f32.mrb[0].mxu0
  %v280 = vadd.f32 0.0, %v279
  %v281 = vpop.f32.mrb[0].mxu0
  %v282 = vadd.f32 0.0, %v281
  %v283 = vpop.f32.mrb[0].mxu0
  %v284 = vadd.f32 0.0, %v283
  %285 = vmatprep.mubr.bf16.mxu0 0
  %286 = vmatmul.mubr.bf16.gmra.mrb[0].mxu0 %v169
  %v287 = vpop.f32.mrb[0].mxu0
  %v288 = vadd.f32 0.0, %v287
  %v289 = vpop.f32.mrb[0].mxu0
  %v290 = vadd.f32 0.0, %v289
  %v291 = vpop.f32.mrb[0].mxu0
  %v292 = vadd.f32 0.0, %v291
  %v293 = vpop.f32.mrb[0].mxu0
  %v294 = vadd.f32 0.0, %v293
  %295 = vdwg.mxu0
  %296 = vmatprep.subr.bf16.mxu0 %v188
  %297 = vmatpush1.bf16.msra.mxu0 %v185
  %298 = vmatprep.subr.bf16.mxu0 0
  %299 = vmatpush1.bf16.msra.mxu0 0
  %300 = vmatprep.subr.bf16.mxu0 0
  %301 = vmatpush1.bf16.msra.mxu0 0
  %302 = vmatprep.subr.bf16.mxu0 0
  %303 = vmatpush1.bf16.msra.mxu0 0
  %304 = vmatprep.subr.bf16.mxu0 0
  %305 = vmatpush1.bf16.msra.mxu0 0
  %306 = vmatprep.subr.bf16.mxu0 0
  %307 = vmatpush1.bf16.msra.mxu0 0
  %308 = vmatprep.subr.bf16.mxu0 0
  %309 = vmatpush1.bf16.msra.mxu0 0
  %310 = vmatprep.subr.bf16.mxu0 0
  %311 = vmatpush1.bf16.msra.mxu0 0
  %312 = vmatprep.subr.bf16.mxu0 0
  %313 = vmatpush1.bf16.msra.mxu0 0
  %314 = vmatprep.subr.bf16.mxu0 0
  %315 = vmatpush1.bf16.msra.mxu0 0
  %316 = vmatprep.subr.bf16.mxu0 0
  %317 = vmatpush1.bf16.msra.mxu0 0
  %318 = vmatprep.subr.bf16.mxu0 0
  %319 = vmatpush1.bf16.msra.mxu0 0
  %320 = vmatprep.subr.bf16.mxu0 0
  %321 = vmatpush1.bf16.msra.mxu0 0
  %322 = vmatprep.subr.bf16.mxu0 0
  %323 = vmatpush1.bf16.msra.mxu0 0
  %324 = vmatprep.subr.bf16.mxu0 0
  %325 = vmatpush1.bf16.msra.mxu0 0
  %326 = vmatprep.subr.bf16.mxu0 0
  %327 = vmatpush1.bf16.msra.mxu0 0
  %328 = vmatprep.mubr.bf16.mxu0 0
  %329 = vmatmul.mubr.bf16.gmra.mrb[0].mxu0 %v166
  %v330 = vpop.f32.mrb[0].mxu0
  %v331 = vadd.f32 0.0, %v330
  %v332 = vpop.f32.mrb[0].mxu0
  %v333 = vadd.f32 0.0, %v332
  %v334 = vpop.f32.mrb[0].mxu0
  %v335 = vadd.f32 0.0, %v334
  %v336 = vpop.f32.mrb[0].mxu0
  %v337 = vadd.f32 0.0, %v336
  %338 = vmatprep.mubr.bf16.mxu0 0
  %339 = vmatmul.mubr.bf16.gmra.mrb[0].mxu0 %v169
  %v340 = vpop.f32.mrb[0].mxu0
  %v341 = vadd.f32 0.0, %v340
  %v342 = vpop.f32.mrb[0].mxu0
  %v343 = vadd.f32 0.0, %v342
  %v344 = vpop.f32.mrb[0].mxu0
  %v345 = vadd.f32 0.0, %v344
  %v346 = vpop.f32.mrb[0].mxu0
  %v347 = vadd.f32 0.0, %v346
  %348 = vdwg.mxu0
  %349 = vst [vmem:[#allocation2] sm:$0xff] %v225
  %350 = vst [vmem:[#allocation2 + $0x8] sm:$0xff] %v227
  %351 = vst [vmem:[#allocation2 + $0x10] sm:$0xff] %v278
  %352 = vst [vmem:[#allocation2 + $0x18] sm:$0xff] %v280
  %353 = vst [vmem:[#allocation2 + $0x20] sm:$0xff] %v331
  %354 = vst [vmem:[#allocation2 + $0x28] sm:$0xff] %v333
  %355 = vst [vmem:[#allocation2 + $0x30] sm:$0xff] %v229
  %356 = vst [vmem:[#allocation2 + $0x38] sm:$0xff] %v231
  %357 = vst [vmem:[#allocation2 + $0x40] sm:$0xff] %v282
  %358 = vst [vmem:[#allocation2 + $0x48] sm:$0xff] %v284
  %359 = vst [vmem:[#allocation2 + $0x50] sm:$0xff] %v335
  %360 = vst [vmem:[#allocation2 + $0x58] sm:$0xff] %v337
  %361 = vst [vmem:[#allocation2 + $0x60] sm:$0xff] %v235
  %362 = vst [vmem:[#allocation2 + $0x68] sm:$0xff] %v237
  %363 = vst [vmem:[#allocation2 + $0x70] sm:$0xff] %v288
  %364 = vst [vmem:[#allocation2 + $0x78] sm:$0xff] %v290
  %365 = vst [vmem:[#allocation2 + $0x80] sm:$0xff] %v341
  %366 = vst [vmem:[#allocation2 + $0x88] sm:$0xff] %v343
  %367 = vst [vmem:[#allocation2 + $0x90] sm:$0xff] %v239
  %368 = vst [vmem:[#allocation2 + $0x98] sm:$0xff] %v241
  %369 = vst [vmem:[#allocation2 + $0xa0] sm:$0xff] %v292
  %370 = vst [vmem:[#allocation2 + $0xa8] sm:$0xff] %v294
  %371 = vst [vmem:[#allocation2 + $0xb0] sm:$0xff] %v345
  %372 = vst [vmem:[#allocation2 + $0xb8] sm:$0xff] %v347
  %v373 = vld [vmem:[%s3] sm:$0xf]
  %v374 = vld [vmem:[%s3 + $0x4] sm:$0xf]
  %v375 = vld [vmem:[%s3 + $0x8] sm:$0xf]
  %v376 = vld [vmem:[%s3 + $0xc] sm:$0xf]
  %s377 = scalar_lea.vmem %s3, 16
  %v378 = vld [vmem:[%s377] sm:$0xf]
  %v379 = vld [vmem:[%s377 + $0x4] sm:$0xf]
  %v380 = vld [vmem:[%s377 + $0x8] sm:$0xf]
  %v381 = vld [vmem:[%s377 + $0xc] sm:$0xf]
  %s382 = scalar_lea.vmem %s3, 32
  %v383 = vld [vmem:[%s382] sm:$0xf]
  %v384 = vld [vmem:[%s382 + $0x4] sm:$0xf]
  %v385 = vld [vmem:[%s382 + $0x8] sm:$0xf]
  %v386 = vld [vmem:[%s382 + $0xc] sm:$0xf]
  %v387 = vld [vmem:[%s4] sm:$0x1]
  %v388 = vlaneseq
  %v389 = vshrl.u32 %v388, 7
  %v390 = vsub.s32 0, %v389
  %v391 = vrot.slane %v387, %v390
  %v392 = vld [vmem:[%s4 + $0x1] sm:$0x1]
  %v393 = vlaneseq
  %v394 = vshrl.u32 %v393, 7
  %v395 = vsub.s32 0, %v394
  %v396 = vrot.slane %v392, %v395
  %v397 = vld [vmem:[%s4 + $0x2] sm:$0x1]
  %v398 = vlaneseq
  %v399 = vshrl.u32 %v398, 7
  %v400 = vsub.s32 0, %v399
  %v401 = vrot.slane %v397, %v400
  %v402 = vld [vmem:[%s4 + $0x3] sm:$0x1]
  %v403 = vlaneseq
  %v404 = vshrl.u32 %v403, 7
  %v405 = vsub.s32 0, %v404
  %v406 = vrot.slane %v402, %v405
  %v407 = vld [vmem:[#allocation2 + $0x8] sm:$0x3]
  %v408 = vadd.f32 %v391, %v407
  %v409 = vld [vmem:[#allocation2 + $0x10] sm:$0xc]
  %v411 = vrot.slane %v409, 2
  %v413 = vadd.f32 %v408, %v411
  %v414 = vld [vmem:[#allocation2 + $0x18] sm:$0x30]
  %v416 = vrot.slane %v414, 4
  %v418 = vadd.f32 %v413, %v416
  %v419 = vld [vmem:[#allocation2 + $0x20] sm:$0xc0]
  %v421 = vrot.slane %v419, 6
  %v423 = vadd.f32 %v418, %v421
  %v424 = vld [vmem:[#allocation2 + $0x58] sm:$0x3]
  %v425 = vadd.f32 %v423, %v424
  %v426 = vld [vmem:[#allocation2] sm:$0xc]
  %v427 = vadd.f32 %v391, %v426
  %v428 = vld [vmem:[#allocation2 + $0x8] sm:$0x30]
  %v430 = vrot.slane %v428, 2
  %v432 = vadd.f32 %v427, %v430
  %v433 = vld [vmem:[#allocation2 + $0x10] sm:$0xc0]
  %v435 = vrot.slane %v433, 4
  %v437 = vadd.f32 %v432, %v435
  %v438 = vld [vmem:[#allocation2 + $0x48] sm:$0x3]
  %v440 = vrot.slane %v438, 6
  %v442 = vadd.f32 %v437, %v440
  %v443 = vld [vmem:[#allocation2 + $0x50] sm:$0xc]
  %v444 = vadd.f32 %v442, %v443
  %v445 = vld [vmem:[#allocation2 + $0x58] sm:$0x30]
  %v447 = vrot.slane %v445, 2
  %v449 = vadd.f32 %v444, %v447
  %v450 = vld [vmem:[#allocation2] sm:$0xc0]
  %v451 = vadd.f32 %v391, %v450
  %v452 = vld [vmem:[#allocation2 + $0x38] sm:$0x3]
  %v454 = vrot.slane %v452, 2
  %v456 = vadd.f32 %v451, %v454
  %v457 = vld [vmem:[#allocation2 + $0x40] sm:$0xc]
  %v459 = vrot.slane %v457, 4
  %v461 = vadd.f32 %v456, %v459
  %v462 = vld [vmem:[#allocation2 + $0x48] sm:$0x30]
  %v464 = vrot.slane %v462, 6
  %v466 = vadd.f32 %v461, %v464
  %v467 = vld [vmem:[#allocation2 + $0x50] sm:$0xc0]
  %v468 = vadd.f32 %v466, %v467
  %v469 = vld [vmem:[#allocation2 + $0x88] sm:$0x3]
  %v471 = vrot.slane %v469, 2
  %v473 = vadd.f32 %v468, %v471
  %v474 = vld [vmem:[#allocation2 + $0x30] sm:$0xc]
  %v475 = vadd.f32 %v391, %v474
  %v476 = vld [vmem:[#allocation2 + $0x38] sm:$0x30]
  %v478 = vrot.slane %v476, 2
  %v480 = vadd.f32 %v475, %v478
  %v481 = vld [vmem:[#allocation2 + $0x40] sm:$0xc0]
  %v483 = vrot.slane %v481, 4
  %v485 = vadd.f32 %v480, %v483
  %v486 = vld [vmem:[#allocation2 + $0x78] sm:$0x3]
  %v488 = vrot.slane %v486, 6
  %v490 = vadd.f32 %v485, %v488
  %v491 = vld [vmem:[#allocation2 + $0x80] sm:$0xc]
  %v492 = vadd.f32 %v490, %v491
  %v493 = vld [vmem:[#allocation2 + $0x88] sm:$0x30]
  %v495 = vrot.slane %v493, 2
  %v497 = vadd.f32 %v492, %v495
  %v498 = vld [vmem:[#allocation2 + $0x30] sm:$0xc0]
  %v499 = vadd.f32 %v391, %v498
  %v500 = vld [vmem:[#allocation2 + $0x68] sm:$0x3]
  %v502 = vrot.slane %v500, 2
  %v504 = vadd.f32 %v499, %v502
  %v505 = vld [vmem:[#allocation2 + $0x70] sm:$0xc]
  %v507 = vrot.slane %v505, 4
  %v509 = vadd.f32 %v504, %v507
  %v510 = vld [vmem:[#allocation2 + $0x78] sm:$0x30]
  %v512 = vrot.slane %v510, 6
  %v514 = vadd.f32 %v509, %v512
  %v515 = vld [vmem:[#allocation2 + $0x80] sm:$0xc0]
  %v516 = vadd.f32 %v514, %v515
  %v517 = vld [vmem:[#allocation2 + $0xb8] sm:$0x3]
  %v519 = vrot.slane %v517, 2
  %v521 = vadd.f32 %v516, %v519
  %v522 = vld [vmem:[#allocation2 + $0x60] sm:$0xc]
  %v523 = vadd.f32 %v391, %v522
  %v524 = vld [vmem:[#allocation2 + $0x68] sm:$0x30]
  %v526 = vrot.slane %v524, 2
  %v528 = vadd.f32 %v523, %v526
  %v529 = vld [vmem:[#allocation2 + $0x70] sm:$0xc0]
  %v531 = vrot.slane %v529, 4
  %v533 = vadd.f32 %v528, %v531
  %v534 = vld [vmem:[#allocation2 + $0xa8] sm:$0x3]
  %v536 = vrot.slane %v534, 6
  %v538 = vadd.f32 %v533, %v536
  %v539 = vld [vmem:[#allocation2 + $0xb0] sm:$0xc]
  %v540 = vadd.f32 %v538, %v539
  %v541 = vld [vmem:[#allocation2 + $0xb8] sm:$0x30]
  %v543 = vrot.slane %v541, 2
  %v545 = vadd.f32 %v540, %v543
  %v546 = vld [vmem:[#allocation2 + $0x60] sm:$0xc0]
  %v547 = vadd.f32 %v391, %v546
  %v548 = vld [vmem:[#allocation2 + $0x98] sm:$0x3]
  %v550 = vrot.slane %v548, 2
  %v552 = vadd.f32 %v547, %v550
  %v553 = vld [vmem:[#allocation2 + $0xa0] sm:$0xc]
  %v555 = vrot.slane %v553, 4
  %v557 = vadd.f32 %v552, %v555
  %v558 = vld [vmem:[#allocation2 + $0xa8] sm:$0x30]
  %v560 = vrot.slane %v558, 6
  %v562 = vadd.f32 %v557, %v560
  %v563 = vld [vmem:[#allocation2 + $0xb0] sm:$0xc0]
  %v564 = vadd.f32 %v562, %v563
  %v569 = vunpack.c.l.b16 %v373
  %v570 = vunpack.c.l.b16 %v374
  %v571 = vunpack.c.l.b16 %v375
  %v572 = vunpack.c.l.b16 %v376
  %v573 = vpack.c.b16 %v570, %v569
  %v574 = vpack.c.b16 %v572, %v571
  %vm577 = vcmask 261120
  %v579 = vsel %vm577, 0, 0
  %581 = vmatprep.subr.bf16.mxu0 0
  %582 = vmatpush1.bf16.msra.mxu0 %v573
  %583 = vmatprep.subr.bf16.mxu0 0
  %584 = vmatpush1.bf16.msra.mxu0 %v574
  %585 = vmatprep.subr.bf16.mxu0 0
  %586 = vmatpush1.bf16.msra.mxu0 0
  %587 = vmatprep.subr.bf16.mxu0 0
  %588 = vmatpush1.bf16.msra.mxu0 0
  %589 = vmatprep.subr.bf16.mxu0 0
  %590 = vmatpush1.bf16.msra.mxu0 0
  %591 = vmatprep.subr.bf16.mxu0 0
  %592 = vmatpush1.bf16.msra.mxu0 0
  %593 = vmatprep.subr.bf16.mxu0 0
  %594 = vmatpush1.bf16.msra.mxu0 0
  %595 = vmatprep.subr.bf16.mxu0 0
  %596 = vmatpush1.bf16.msra.mxu0 0
  %597 = vmatprep.subr.bf16.mxu0 0
  %598 = vmatpush1.bf16.msra.mxu0 0
  %599 = vmatprep.subr.bf16.mxu0 0
  %600 = vmatpush1.bf16.msra.mxu0 0
  %601 = vmatprep.subr.bf16.mxu0 0
  %602 = vmatpush1.bf16.msra.mxu0 0
  %603 = vmatprep.subr.bf16.mxu0 0
  %604 = vmatpush1.bf16.msra.mxu0 0
  %605 = vmatprep.subr.bf16.mxu0 0
  %606 = vmatpush1.bf16.msra.mxu0 0
  %607 = vmatprep.subr.bf16.mxu0 0
  %608 = vmatpush1.bf16.msra.mxu0 0
  %609 = vmatprep.subr.bf16.mxu0 0
  %610 = vmatpush1.bf16.msra.mxu0 0
  %611 = vmatprep.subr.bf16.mxu0 0
  %612 = vmatpush1.bf16.msra.mxu0 0
  %613 = vmatprep.mubr.bf16.mxu0 0
  %614 = vmatmul.mubr.bf16.gmra.mrb[0].mxu0 %v579
  %v615 = vpop.f32.mrb[0].mxu0
  %v616 = vadd.f32 %v396, %v615
  %v617 = vpop.f32.mrb[0].mxu0
  %v618 = vpop.f32.mrb[0].mxu0
  %v619 = vpop.f32.mrb[0].mxu0
  %620 = vdwg.mxu0
  %v621 = vadd.f32 %v425, %v616
  %v622 = vxor.u32 %v621, 2147483648
  %v623 = vmul.f32 %v622, 1.442695
  %v624 = vpow.pop %v623
  %v625 = vadd.f32 %v624, 1.0
  %v626 = vrcp.pop %v625
  %v627 = vmul.f32 1.0, %v626
  %629 = vrot.lane.b32.xlu0 %v616, 64
  %v630 = vpop.permute.xlu0 %629
  %v632 = vmul.f32 %v627, %v630
  %634 = vrot.lane.b32.xlu0 %v632, 64
  %v635 = vpop.permute.xlu0 %634
  %v637 = vadd.f32 %v425, %v635
  %v638 = vtanh.pop %v637
  %v639 = vsub.f32 1.0, %v627
  %641 = vrot.lane.b32.xlu0 %v638, 96
  %v642 = vpop.permute.xlu0 %641
  %v644 = vmul.f32 %v639, %v642
  %v645 = vmul.f32 %v627, 0.0
  %v646 = vadd.f32 %v644, %v645
  %v647 = vpack.c.bf16 %v646, %v646
  %649 = vrot.lane.b32.xlu0 %v647, 96
  %v650 = vpop.permute.xlu0 %649
  %v655 = vunpack.c.l.b16 %v378
  %v656 = vunpack.c.l.b16 %v379
  %v657 = vunpack.c.l.b16 %v380
  %v658 = vunpack.c.l.b16 %v381
  %v659 = vpack.c.b16 %v656, %v655
  %v660 = vpack.c.b16 %v658, %v657
  %v664 = vsel %vm577, %v650, 0
  %666 = vmatprep.subr.bf16.mxu0 0
  %667 = vmatpush1.bf16.msra.mxu0 %v659
  %668 = vmatprep.subr.bf16.mxu0 0
  %669 = vmatpush1.bf16.msra.mxu0 %v660
  %670 = vmatprep.subr.bf16.mxu0 0
  %671 = vmatpush1.bf16.msra.mxu0 0
  %672 = vmatprep.subr.bf16.mxu0 0
  %673 = vmatpush1.bf16.msra.mxu0 0
  %674 = vmatprep.subr.bf16.mxu0 0
  %675 = vmatpush1.bf16.msra.mxu0 0
  %676 = vmatprep.subr.bf16.mxu0 0
  %677 = vmatpush1.bf16.msra.mxu0 0
  %678 = vmatprep.subr.bf16.mxu0 0
  %679 = vmatpush1.bf16.msra.mxu0 0
  %680 = vmatprep.subr.bf16.mxu0 0
  %681 = vmatpush1.bf16.msra.mxu0 0
  %682 = vmatprep.subr.bf16.mxu0 0
  %683 = vmatpush1.bf16.msra.mxu0 0
  %684 = vmatprep.subr.bf16.mxu0 0
  %685 = vmatpush1.bf16.msra.mxu0 0
  %686 = vmatprep.subr.bf16.mxu0 0
  %687 = vmatpush1.bf16.msra.mxu0 0
  %688 = vmatprep.subr.bf16.mxu0 0
  %689 = vmatpush1.bf16.msra.mxu0 0
  %690 = vmatprep.subr.bf16.mxu0 0
  %691 = vmatpush1.bf16.msra.mxu0 0
  %692 = vmatprep.subr.bf16.mxu0 0
  %693 = vmatpush1.bf16.msra.mxu0 0
  %694 = vmatprep.subr.bf16.mxu0 0
  %695 = vmatpush1.bf16.msra.mxu0 0
  %696 = vmatprep.subr.bf16.mxu0 0
  %697 = vmatpush1.bf16.msra.mxu0 0
  %698 = vmatprep.mubr.bf16.mxu0 0
  %699 = vmatmul.mubr.bf16.gmra.mrb[0].mxu0 %v664
  %v700 = vpop.f32.mrb[0].mxu0
  %v701 = vadd.f32 %v401, %v700
  %v702 = vpop.f32.mrb[0].mxu0
  %v703 = vpop.f32.mrb[0].mxu0
  %v704 = vpop.f32.mrb[0].mxu0
  %705 = vdwg.mxu0
  %v710 = vunpack.c.l.b16 %v383
  %v711 = vunpack.c.l.b16 %v384
  %v712 = vunpack.c.l.b16 %v385
  %v713 = vunpack.c.l.b16 %v386
  %v714 = vpack.c.b16 %v711, %v710
  %v715 = vpack.c.b16 %v713, %v712
  %718 = vmatprep.subr.bf16.mxu0 0
  %719 = vmatpush1.bf16.msra.mxu0 %v714
  %720 = vmatprep.subr.bf16.mxu0 0
  %721 = vmatpush1.bf16.msra.mxu0 %v715
  %722 = vmatprep.subr.bf16.mxu0 0
  %723 = vmatpush1.bf16.msra.mxu0 0
  %724 = vmatprep.subr.bf16.mxu0 0
  %725 = vmatpush1.bf16.msra.mxu0 0
  %726 = vmatprep.subr.bf16.mxu0 0
  %727 = vmatpush1.bf16.msra.mxu0 0
  %728 = vmatprep.subr.bf16.mxu0 0
  %729 = vmatpush1.bf16.msra.mxu0 0
  %730 = vmatprep.subr.bf16.mxu0 0
  %731 = vmatpush1.bf16.msra.mxu0 0
  %732 = vmatprep.subr.bf16.mxu0 0
  %733 = vmatpush1.bf16.msra.mxu0 0
  %734 = vmatprep.subr.bf16.mxu0 0
  %735 = vmatpush1.bf16.msra.mxu0 0
  %736 = vmatprep.subr.bf16.mxu0 0
  %737 = vmatpush1.bf16.msra.mxu0 0
  %738 = vmatprep.subr.bf16.mxu0 0
  %739 = vmatpush1.bf16.msra.mxu0 0
  %740 = vmatprep.subr.bf16.mxu0 0
  %741 = vmatpush1.bf16.msra.mxu0 0
  %742 = vmatprep.subr.bf16.mxu0 0
  %743 = vmatpush1.bf16.msra.mxu0 0
  %744 = vmatprep.subr.bf16.mxu0 0
  %745 = vmatpush1.bf16.msra.mxu0 0
  %746 = vmatprep.subr.bf16.mxu0 0
  %747 = vmatpush1.bf16.msra.mxu0 0
  %748 = vmatprep.subr.bf16.mxu0 0
  %749 = vmatpush1.bf16.msra.mxu0 0
  %750 = vmatprep.mubr.bf16.mxu0 0
  %751 = vmatmul.mubr.bf16.gmra.mrb[0].mxu0 %v579
  %v752 = vpop.f32.mrb[0].mxu0
  %v753 = vadd.f32 %v406, %v752
  %v754 = vpop.f32.mrb[0].mxu0
  %v755 = vpop.f32.mrb[0].mxu0
  %v756 = vpop.f32.mrb[0].mxu0
  %757 = vdwg.mxu0
  %v758 = vadd.f32 %v701, %v753
  %v759 = vxor.u32 %v758, 2147483648
  %v760 = vmul.f32 %v759, 1.442695
  %v761 = vpow.pop %v760
  %v762 = vadd.f32 %v761, 1.0
  %v763 = vrcp.pop %v762
  %v764 = vmul.f32 1.0, %v763
  %766 = vrot.lane.b32.xlu0 %v753, 64
  %v767 = vpop.permute.xlu0 %766
  %v769 = vmul.f32 %v764, %v767
  %771 = vrot.lane.b32.xlu0 %v769, 64
  %v772 = vpop.permute.xlu0 %771
  %v774 = vadd.f32 %v701, %v772
  %v775 = vtanh.pop %v774
  %v776 = vsub.f32 1.0, %v764
  %778 = vrot.lane.b32.xlu0 %v775, 96
  %v779 = vpop.permute.xlu0 %778
  %v781 = vmul.f32 %v776, %v779
  %v782 = vmul.f32 %v764, 0.0
  %v783 = vadd.f32 %v781, %v782
  %784 = vmatprep.subr.bf16.mxu0 0
  %785 = vmatpush1.bf16.msra.mxu0 %v573
  %786 = vmatprep.subr.bf16.mxu0 0
  %787 = vmatpush1.bf16.msra.mxu0 %v574
  %788 = vmatprep.subr.bf16.mxu0 0
  %789 = vmatpush1.bf16.msra.mxu0 0
  %790 = vmatprep.subr.bf16.mxu0 0
  %791 = vmatpush1.bf16.msra.mxu0 0
  %792 = vmatprep.subr.bf16.mxu0 0
  %793 = vmatpush1.bf16.msra.mxu0 0
  %794 = vmatprep.subr.bf16.mxu0 0
  %795 = vmatpush1.bf16.msra.mxu0 0
  %796 = vmatprep.subr.bf16.mxu0 0
  %797 = vmatpush1.bf16.msra.mxu0 0
  %798 = vmatprep.subr.bf16.mxu0 0
  %799 = vmatpush1.bf16.msra.mxu0 0
  %800 = vmatprep.subr.bf16.mxu0 0
  %801 = vmatpush1.bf16.msra.mxu0 0
  %802 = vmatprep.subr.bf16.mxu0 0
  %803 = vmatpush1.bf16.msra.mxu0 0
  %804 = vmatprep.subr.bf16.mxu0 0
  %805 = vmatpush1.bf16.msra.mxu0 0
  %806 = vmatprep.subr.bf16.mxu0 0
  %807 = vmatpush1.bf16.msra.mxu0 0
  %808 = vmatprep.subr.bf16.mxu0 0
  %809 = vmatpush1.bf16.msra.mxu0 0
  %810 = vmatprep.subr.bf16.mxu0 0
  %811 = vmatpush1.bf16.msra.mxu0 0
  %812 = vmatprep.subr.bf16.mxu0 0
  %813 = vmatpush1.bf16.msra.mxu0 0
  %814 = vmatprep.subr.bf16.mxu0 0
  %815 = vmatpush1.bf16.msra.mxu0 0
  %816 = vmatprep.mubr.bf16.mxu0 0
  %817 = vmatmul.mubr.bf16.gmra.mrb[0].mxu0 %v664
  %v818 = vpop.f32.mrb[0].mxu0
  %v819 = vadd.f32 %v396, %v818
  %v820 = vpop.f32.mrb[0].mxu0
  %v821 = vpop.f32.mrb[0].mxu0
  %v822 = vpop.f32.mrb[0].mxu0
  %823 = vdwg.mxu0
  %v825 = vrot.slane %v819, 6
  %v827 = vadd.f32 %v449, %v825
  %v828 = vxor.u32 %v827, 2147483648
  %v829 = vmul.f32 %v828, 1.442695
  %v830 = vpow.pop %v829
  %v831 = vadd.f32 %v830, 1.0
  %v832 = vrcp.pop %v831
  %v833 = vmul.f32 1.0, %v832
  %834 = vrot.lane.b32.xlu0 %v825, 64
  %v835 = vpop.permute.xlu0 %834
  %v837 = vmul.f32 %v833, %v835
  %839 = vrot.lane.b32.xlu0 %v837, 64
  %v840 = vpop.permute.xlu0 %839
  %v842 = vadd.f32 %v449, %v840
  %v843 = vtanh.pop %v842
  %v844 = vsub.f32 1.0, %v833
  %846 = vrot.lane.b32.xlu0 %v843, 96
  %v847 = vpop.permute.xlu0 %846
  %v849 = vmul.f32 %v844, %v847
  %v851 = vrot.slane %v646, 6
  %v853 = vmul.f32 %v833, %v851
  %v854 = vadd.f32 %v849, %v853
  %v855 = vpack.c.bf16 %v854, %v854
  %v857 = vrot.slane %v855, 1
  %858 = vrot.lane.b32.xlu0 %v857, 96
  %v859 = vpop.permute.xlu0 %858
  %v861 = vsel %vm577, %v859, 0
  %863 = vmatprep.subr.bf16.mxu0 0
  %864 = vmatpush1.bf16.msra.mxu0 %v659
  %865 = vmatprep.subr.bf16.mxu0 0
  %866 = vmatpush1.bf16.msra.mxu0 %v660
  %867 = vmatprep.subr.bf16.mxu0 0
  %868 = vmatpush1.bf16.msra.mxu0 0
  %869 = vmatprep.subr.bf16.mxu0 0
  %870 = vmatpush1.bf16.msra.mxu0 0
  %871 = vmatprep.subr.bf16.mxu0 0
  %872 = vmatpush1.bf16.msra.mxu0 0
  %873 = vmatprep.subr.bf16.mxu0 0
  %874 = vmatpush1.bf16.msra.mxu0 0
  %875 = vmatprep.subr.bf16.mxu0 0
  %876 = vmatpush1.bf16.msra.mxu0 0
  %877 = vmatprep.subr.bf16.mxu0 0
  %878 = vmatpush1.bf16.msra.mxu0 0
  %879 = vmatprep.subr.bf16.mxu0 0
  %880 = vmatpush1.bf16.msra.mxu0 0
  %881 = vmatprep.subr.bf16.mxu0 0
  %882 = vmatpush1.bf16.msra.mxu0 0
  %883 = vmatprep.subr.bf16.mxu0 0
  %884 = vmatpush1.bf16.msra.mxu0 0
  %885 = vmatprep.subr.bf16.mxu0 0
  %886 = vmatpush1.bf16.msra.mxu0 0
  %887 = vmatprep.subr.bf16.mxu0 0
  %888 = vmatpush1.bf16.msra.mxu0 0
  %889 = vmatprep.subr.bf16.mxu0 0
  %890 = vmatpush1.bf16.msra.mxu0 0
  %891 = vmatprep.subr.bf16.mxu0 0
  %892 = vmatpush1.bf16.msra.mxu0 0
  %893 = vmatprep.subr.bf16.mxu0 0
  %894 = vmatpush1.bf16.msra.mxu0 0
  %895 = vmatprep.mubr.bf16.mxu0 0
  %896 = vmatmul.mubr.bf16.gmra.mrb[0].mxu0 %v861
  %v897 = vpop.f32.mrb[0].mxu0
  %v898 = vadd.f32 %v401, %v897
  %v899 = vpop.f32.mrb[0].mxu0
  %v900 = vpop.f32.mrb[0].mxu0
  %v901 = vpop.f32.mrb[0].mxu0
  %902 = vdwg.mxu0
  %v903 = vpack.c.bf16 %v783, %v783
  %905 = vrot.lane.b32.xlu0 %v903, 96
  %v906 = vpop.permute.xlu0 %905
  %v908 = vsel %vm577, %v906, 0
  %910 = vmatprep.subr.bf16.mxu0 0
  %911 = vmatpush1.bf16.msra.mxu0 %v714
  %912 = vmatprep.subr.bf16.mxu0 0
  %913 = vmatpush1.bf16.msra.mxu0 %v715
  %914 = vmatprep.subr.bf16.mxu0 0
  %915 = vmatpush1.bf16.msra.mxu0 0
  %916 = vmatprep.subr.bf16.mxu0 0
  %917 = vmatpush1.bf16.msra.mxu0 0
  %918 = vmatprep.subr.bf16.mxu0 0
  %919 = vmatpush1.bf16.msra.mxu0 0
  %920 = vmatprep.subr.bf16.mxu0 0
  %921 = vmatpush1.bf16.msra.mxu0 0
  %922 = vmatprep.subr.bf16.mxu0 0
  %923 = vmatpush1.bf16.msra.mxu0 0
  %924 = vmatprep.subr.bf16.mxu0 0
  %925 = vmatpush1.bf16.msra.mxu0 0
  %926 = vmatprep.subr.bf16.mxu0 0
  %927 = vmatpush1.bf16.msra.mxu0 0
  %928 = vmatprep.subr.bf16.mxu0 0
  %929 = vmatpush1.bf16.msra.mxu0 0
  %930 = vmatprep.subr.bf16.mxu0 0
  %931 = vmatpush1.bf16.msra.mxu0 0
  %932 = vmatprep.subr.bf16.mxu0 0
  %933 = vmatpush1.bf16.msra.mxu0 0
  %934 = vmatprep.subr.bf16.mxu0 0
  %935 = vmatpush1.bf16.msra.mxu0 0
  %936 = vmatprep.subr.bf16.mxu0 0
  %937 = vmatpush1.bf16.msra.mxu0 0
  %938 = vmatprep.subr.bf16.mxu0 0
  %939 = vmatpush1.bf16.msra.mxu0 0
  %940 = vmatprep.subr.bf16.mxu0 0
  %941 = vmatpush1.bf16.msra.mxu0 0
  %942 = vmatprep.mubr.bf16.mxu0 0
  %943 = vmatmul.mubr.bf16.gmra.mrb[0].mxu0 %v908
  %v944 = vpop.f32.mrb[0].mxu0
  %v945 = vadd.f32 %v406, %v944
  %v946 = vpop.f32.mrb[0].mxu0
  %v947 = vpop.f32.mrb[0].mxu0
  %v948 = vpop.f32.mrb[0].mxu0
  %949 = vdwg.mxu0
  %v950 = vadd.f32 %v898, %v945
  %v951 = vxor.u32 %v950, 2147483648
  %v952 = vmul.f32 %v951, 1.442695
  %v953 = vpow.pop %v952
  %v954 = vadd.f32 %v953, 1.0
  %v955 = vrcp.pop %v954
  %v956 = vmul.f32 1.0, %v955
  %958 = vrot.lane.b32.xlu0 %v945, 64
  %v959 = vpop.permute.xlu0 %958
  %v961 = vmul.f32 %v956, %v959
  %963 = vrot.lane.b32.xlu0 %v961, 64
  %v964 = vpop.permute.xlu0 %963
  %v966 = vadd.f32 %v898, %v964
  %v967 = vtanh.pop %v966
  %v968 = vsub.f32 1.0, %v956
  %970 = vrot.lane.b32.xlu0 %v967, 96
  %v971 = vpop.permute.xlu0 %970
  %v973 = vmul.f32 %v968, %v971
  %v974 = vmul.f32 %v956, %v783
  %v975 = vadd.f32 %v973, %v974
  %976 = vmatprep.subr.bf16.mxu0 0
  %977 = vmatpush1.bf16.msra.mxu0 %v573
  %978 = vmatprep.subr.bf16.mxu0 0
  %979 = vmatpush1.bf16.msra.mxu0 %v574
  %980 = vmatprep.subr.bf16.mxu0 0
  %981 = vmatpush1.bf16.msra.mxu0 0
  %982 = vmatprep.subr.bf16.mxu0 0
  %983 = vmatpush1.bf16.msra.mxu0 0
  %984 = vmatprep.subr.bf16.mxu0 0
  %985 = vmatpush1.bf16.msra.mxu0 0
  %986 = vmatprep.subr.bf16.mxu0 0
  %987 = vmatpush1.bf16.msra.mxu0 0
  %988 = vmatprep.subr.bf16.mxu0 0
  %989 = vmatpush1.bf16.msra.mxu0 0
  %990 = vmatprep.subr.bf16.mxu0 0
  %991 = vmatpush1.bf16.msra.mxu0 0
  %992 = vmatprep.subr.bf16.mxu0 0
  %993 = vmatpush1.bf16.msra.mxu0 0
  %994 = vmatprep.subr.bf16.mxu0 0
  %995 = vmatpush1.bf16.msra.mxu0 0
  %996 = vmatprep.subr.bf16.mxu0 0
  %997 = vmatpush1.bf16.msra.mxu0 0
  %998 = vmatprep.subr.bf16.mxu0 0
  %999 = vmatpush1.bf16.msra.mxu0 0
  %1000 = vmatprep.subr.bf16.mxu0 0
  %1001 = vmatpush1.bf16.msra.mxu0 0
  %1002 = vmatprep.subr.bf16.mxu0 0
  %1003 = vmatpush1.bf16.msra.mxu0 0
  %1004 = vmatprep.subr.bf16.mxu0 0
  %1005 = vmatpush1.bf16.msra.mxu0 0
  %1006 = vmatprep.subr.bf16.mxu0 0
  %1007 = vmatpush1.bf16.msra.mxu0 0
  %1008 = vmatprep.mubr.bf16.mxu0 0
  %1009 = vmatmul.mubr.bf16.gmra.mrb[0].mxu0 %v861
  %v1010 = vpop.f32.mrb[0].mxu0
  %v1011 = vadd.f32 %v396, %v1010
  %v1012 = vpop.f32.mrb[0].mxu0
  %v1013 = vpop.f32.mrb[0].mxu0
  %v1014 = vpop.f32.mrb[0].mxu0
  %1015 = vdwg.mxu0
  %v1017 = vrot.slane %v1011, 2
  %v1019 = vadd.f32 %v473, %v1017
  %v1020 = vxor.u32 %v1019, 2147483648
  %v1021 = vmul.f32 %v1020, 1.442695
  %v1022 = vpow.pop %v1021
  %v1023 = vadd.f32 %v1022, 1.0
  %v1024 = vrcp.pop %v1023
  %v1025 = vmul.f32 1.0, %v1024
  %1026 = vrot.lane.b32.xlu0 %v1017, 64
  %v1027 = vpop.permute.xlu0 %1026
  %v1029 = vmul.f32 %v1025, %v1027
  %1031 = vrot.lane.b32.xlu0 %v1029, 64
  %v1032 = vpop.permute.xlu0 %1031
  %v1034 = vadd.f32 %v473, %v1032
  %v1035 = vtanh.pop %v1034
  %v1036 = vsub.f32 1.0, %v1025
  %1038 = vrot.lane.b32.xlu0 %v1035, 96
  %v1039 = vpop.permute.xlu0 %1038
  %v1041 = vmul.f32 %v1036, %v1039
  %v1043 = vrot.slane %v854, 4
  %v1045 = vmul.f32 %v1025, %v1043
  %v1046 = vadd.f32 %v1041, %v1045
  %v1047 = vpack.c.bf16 %v1046, %v1046
  %v1049 = vrot.slane %v1047, 3
  %1050 = vrot.lane.b32.xlu0 %v1049, 96
  %v1051 = vpop.permute.xlu0 %1050
  %v1053 = vsel %vm577, %v1051, 0
  %1055 = vmatprep.subr.bf16.mxu0 0
  %1056 = vmatpush1.bf16.msra.mxu0 %v659
  %1057 = vmatprep.subr.bf16.mxu0 0
  %1058 = vmatpush1.bf16.msra.mxu0 %v660
  %1059 = vmatprep.subr.bf16.mxu0 0
  %1060 = vmatpush1.bf16.msra.mxu0 0
  %1061 = vmatprep.subr.bf16.mxu0 0
  %1062 = vmatpush1.bf16.msra.mxu0 0
  %1063 = vmatprep.subr.bf16.mxu0 0
  %1064 = vmatpush1.bf16.msra.mxu0 0
  %1065 = vmatprep.subr.bf16.mxu0 0
  %1066 = vmatpush1.bf16.msra.mxu0 0
  %1067 = vmatprep.subr.bf16.mxu0 0
  %1068 = vmatpush1.bf16.msra.mxu0 0
  %1069 = vmatprep.subr.bf16.mxu0 0
  %1070 = vmatpush1.bf16.msra.mxu0 0
  %1071 = vmatprep.subr.bf16.mxu0 0
  %1072 = vmatpush1.bf16.msra.mxu0 0
  %1073 = vmatprep.subr.bf16.mxu0 0
  %1074 = vmatpush1.bf16.msra.mxu0 0
  %1075 = vmatprep.subr.bf16.mxu0 0
  %1076 = vmatpush1.bf16.msra.mxu0 0
  %1077 = vmatprep.subr.bf16.mxu0 0
  %1078 = vmatpush1.bf16.msra.mxu0 0
  %1079 = vmatprep.subr.bf16.mxu0 0
  %1080 = vmatpush1.bf16.msra.mxu0 0
  %1081 = vmatprep.subr.bf16.mxu0 0
  %1082 = vmatpush1.bf16.msra.mxu0 0
  %1083 = vmatprep.subr.bf16.mxu0 0
  %1084 = vmatpush1.bf16.msra.mxu0 0
  %1085 = vmatprep.subr.bf16.mxu0 0
  %1086 = vmatpush1.bf16.msra.mxu0 0
  %1087 = vmatprep.mubr.bf16.mxu0 0
  %1088 = vmatmul.mubr.bf16.gmra.mrb[0].mxu0 %v1053
  %v1089 = vpop.f32.mrb[0].mxu0
  %v1090 = vadd.f32 %v401, %v1089
  %v1091 = vpop.f32.mrb[0].mxu0
  %v1092 = vpop.f32.mrb[0].mxu0
  %v1093 = vpop.f32.mrb[0].mxu0
  %1094 = vdwg.mxu0
  %v1095 = vpack.c.bf16 %v975, %v975
  %1097 = vrot.lane.b32.xlu0 %v1095, 96
  %v1098 = vpop.permute.xlu0 %1097
  %v1100 = vsel %vm577, %v1098, 0
  %1102 = vmatprep.subr.bf16.mxu0 0
  %1103 = vmatpush1.bf16.msra.mxu0 %v714
  %1104 = vmatprep.subr.bf16.mxu0 0
  %1105 = vmatpush1.bf16.msra.mxu0 %v715
  %1106 = vmatprep.subr.bf16.mxu0 0
  %1107 = vmatpush1.bf16.msra.mxu0 0
  %1108 = vmatprep.subr.bf16.mxu0 0
  %1109 = vmatpush1.bf16.msra.mxu0 0
  %1110 = vmatprep.subr.bf16.mxu0 0
  %1111 = vmatpush1.bf16.msra.mxu0 0
  %1112 = vmatprep.subr.bf16.mxu0 0
  %1113 = vmatpush1.bf16.msra.mxu0 0
  %1114 = vmatprep.subr.bf16.mxu0 0
  %1115 = vmatpush1.bf16.msra.mxu0 0
  %1116 = vmatprep.subr.bf16.mxu0 0
  %1117 = vmatpush1.bf16.msra.mxu0 0
  %1118 = vmatprep.subr.bf16.mxu0 0
  %1119 = vmatpush1.bf16.msra.mxu0 0
  %1120 = vmatprep.subr.bf16.mxu0 0
  %1121 = vmatpush1.bf16.msra.mxu0 0
  %1122 = vmatprep.subr.bf16.mxu0 0
  %1123 = vmatpush1.bf16.msra.mxu0 0
  %1124 = vmatprep.subr.bf16.mxu0 0
  %1125 = vmatpush1.bf16.msra.mxu0 0
  %1126 = vmatprep.subr.bf16.mxu0 0
  %1127 = vmatpush1.bf16.msra.mxu0 0
  %1128 = vmatprep.subr.bf16.mxu0 0
  %1129 = vmatpush1.bf16.msra.mxu0 0
  %1130 = vmatprep.subr.bf16.mxu0 0
  %1131 = vmatpush1.bf16.msra.mxu0 0
  %1132 = vmatprep.subr.bf16.mxu0 0
  %1133 = vmatpush1.bf16.msra.mxu0 0
  %1134 = vmatprep.mubr.bf16.mxu0 0
  %1135 = vmatmul.mubr.bf16.gmra.mrb[0].mxu0 %v1100
  %v1136 = vpop.f32.mrb[0].mxu0
  %v1137 = vadd.f32 %v406, %v1136
  %v1138 = vpop.f32.mrb[0].mxu0
  %v1139 = vpop.f32.mrb[0].mxu0
  %v1140 = vpop.f32.mrb[0].mxu0
  %1141 = vdwg.mxu0
  %v1142 = vadd.f32 %v1090, %v1137
  %v1143 = vxor.u32 %v1142, 2147483648
  %v1144 = vmul.f32 %v1143, 1.442695
  %v1145 = vpow.pop %v1144
  %v1146 = vadd.f32 %v1145, 1.0
  %v1147 = vrcp.pop %v1146
  %v1148 = vmul.f32 1.0, %v1147
  %1150 = vrot.lane.b32.xlu0 %v1137, 64
  %v1151 = vpop.permute.xlu0 %1150
  %v1153 = vmul.f32 %v1148, %v1151
  %1155 = vrot.lane.b32.xlu0 %v1153, 64
  %v1156 = vpop.permute.xlu0 %1155
  %v1158 = vadd.f32 %v1090, %v1156
  %v1159 = vtanh.pop %v1158
  %v1160 = vsub.f32 1.0, %v1148
  %1162 = vrot.lane.b32.xlu0 %v1159, 96
  %v1163 = vpop.permute.xlu0 %1162
  %v1165 = vmul.f32 %v1160, %v1163
  %v1166 = vmul.f32 %v1148, %v975
  %v1167 = vadd.f32 %v1165, %v1166
  %1168 = vmatprep.subr.bf16.mxu0 0
  %1169 = vmatpush1.bf16.msra.mxu0 %v573
  %1170 = vmatprep.subr.bf16.mxu0 0
  %1171 = vmatpush1.bf16.msra.mxu0 %v574
  %1172 = vmatprep.subr.bf16.mxu0 0
  %1173 = vmatpush1.bf16.msra.mxu0 0
  %1174 = vmatprep.subr.bf16.mxu0 0
  %1175 = vmatpush1.bf16.msra.mxu0 0
  %1176 = vmatprep.subr.bf16.mxu0 0
  %1177 = vmatpush1.bf16.msra.mxu0 0
  %1178 = vmatprep.subr.bf16.mxu0 0
  %1179 = vmatpush1.bf16.msra.mxu0 0
  %1180 = vmatprep.subr.bf16.mxu0 0
  %1181 = vmatpush1.bf16.msra.mxu0 0
  %1182 = vmatprep.subr.bf16.mxu0 0
  %1183 = vmatpush1.bf16.msra.mxu0 0
  %1184 = vmatprep.subr.bf16.mxu0 0
  %1185 = vmatpush1.bf16.msra.mxu0 0
  %1186 = vmatprep.subr.bf16.mxu0 0
  %1187 = vmatpush1.bf16.msra.mxu0 0
  %1188 = vmatprep.subr.bf16.mxu0 0
  %1189 = vmatpush1.bf16.msra.mxu0 0
  %1190 = vmatprep.subr.bf16.mxu0 0
  %1191 = vmatpush1.bf16.msra.mxu0 0
  %1192 = vmatprep.subr.bf16.mxu0 0
  %1193 = vmatpush1.bf16.msra.mxu0 0
  %1194 = vmatprep.subr.bf16.mxu0 0
  %1195 = vmatpush1.bf16.msra.mxu0 0
  %1196 = vmatprep.subr.bf16.mxu0 0
  %1197 = vmatpush1.bf16.msra.mxu0 0
  %1198 = vmatprep.subr.bf16.mxu0 0
  %1199 = vmatpush1.bf16.msra.mxu0 0
  %1200 = vmatprep.mubr.bf16.mxu0 0
  %1201 = vmatmul.mubr.bf16.gmra.mrb[0].mxu0 %v1053
  %v1202 = vpop.f32.mrb[0].mxu0
  %v1203 = vadd.f32 %v396, %v1202
  %v1204 = vpop.f32.mrb[0].mxu0
  %v1205 = vpop.f32.mrb[0].mxu0
  %v1206 = vpop.f32.mrb[0].mxu0
  %1207 = vdwg.mxu0
  %v1209 = vrot.slane %v1203, 6
  %v1211 = vadd.f32 %v497, %v1209
  %v1212 = vxor.u32 %v1211, 2147483648
  %v1213 = vmul.f32 %v1212, 1.442695
  %v1214 = vpow.pop %v1213
  %v1215 = vadd.f32 %v1214, 1.0
  %v1216 = vrcp.pop %v1215
  %v1217 = vmul.f32 1.0, %v1216
  %1218 = vrot.lane.b32.xlu0 %v1209, 64
  %v1219 = vpop.permute.xlu0 %1218
  %v1221 = vmul.f32 %v1217, %v1219
  %1223 = vrot.lane.b32.xlu0 %v1221, 64
  %v1224 = vpop.permute.xlu0 %1223
  %v1226 = vadd.f32 %v497, %v1224
  %v1227 = vtanh.pop %v1226
  %v1228 = vsub.f32 1.0, %v1217
  %1230 = vrot.lane.b32.xlu0 %v1227, 96
  %v1231 = vpop.permute.xlu0 %1230
  %v1233 = vmul.f32 %v1228, %v1231
  %v1235 = vrot.slane %v1046, 4
  %v1237 = vmul.f32 %v1217, %v1235
  %v1238 = vadd.f32 %v1233, %v1237
  %v1239 = vpack.c.bf16 %v1238, %v1238
  %v1241 = vrot.slane %v1239, 1
  %1242 = vrot.lane.b32.xlu0 %v1241, 96
  %v1243 = vpop.permute.xlu0 %1242
  %v1245 = vsel %vm577, %v1243, 0
  %1247 = vmatprep.subr.bf16.mxu0 0
  %1248 = vmatpush1.bf16.msra.mxu0 %v659
  %1249 = vmatprep.subr.bf16.mxu0 0
  %1250 = vmatpush1.bf16.msra.mxu0 %v660
  %1251 = vmatprep.subr.bf16.mxu0 0
  %1252 = vmatpush1.bf16.msra.mxu0 0
  %1253 = vmatprep.subr.bf16.mxu0 0
  %1254 = vmatpush1.bf16.msra.mxu0 0
  %1255 = vmatprep.subr.bf16.mxu0 0
  %1256 = vmatpush1.bf16.msra.mxu0 0
  %1257 = vmatprep.subr.bf16.mxu0 0
  %1258 = vmatpush1.bf16.msra.mxu0 0
  %1259 = vmatprep.subr.bf16.mxu0 0
  %1260 = vmatpush1.bf16.msra.mxu0 0
  %1261 = vmatprep.subr.bf16.mxu0 0
  %1262 = vmatpush1.bf16.msra.mxu0 0
  %1263 = vmatprep.subr.bf16.mxu0 0
  %1264 = vmatpush1.bf16.msra.mxu0 0
  %1265 = vmatprep.subr.bf16.mxu0 0
  %1266 = vmatpush1.bf16.msra.mxu0 0
  %1267 = vmatprep.subr.bf16.mxu0 0
  %1268 = vmatpush1.bf16.msra.mxu0 0
  %1269 = vmatprep.subr.bf16.mxu0 0
  %1270 = vmatpush1.bf16.msra.mxu0 0
  %1271 = vmatprep.subr.bf16.mxu0 0
  %1272 = vmatpush1.bf16.msra.mxu0 0
  %1273 = vmatprep.subr.bf16.mxu0 0
  %1274 = vmatpush1.bf16.msra.mxu0 0
  %1275 = vmatprep.subr.bf16.mxu0 0
  %1276 = vmatpush1.bf16.msra.mxu0 0
  %1277 = vmatprep.subr.bf16.mxu0 0
  %1278 = vmatpush1.bf16.msra.mxu0 0
  %1279 = vmatprep.mubr.bf16.mxu0 0
  %1280 = vmatmul.mubr.bf16.gmra.mrb[0].mxu0 %v1245
  %v1281 = vpop.f32.mrb[0].mxu0
  %v1282 = vadd.f32 %v401, %v1281
  %v1283 = vpop.f32.mrb[0].mxu0
  %v1284 = vpop.f32.mrb[0].mxu0
  %v1285 = vpop.f32.mrb[0].mxu0
  %1286 = vdwg.mxu0
  %v1287 = vpack.c.bf16 %v1167, %v1167
  %1289 = vrot.lane.b32.xlu0 %v1287, 96
  %v1290 = vpop.permute.xlu0 %1289
  %v1292 = vsel %vm577, %v1290, 0
  %1294 = vmatprep.subr.bf16.mxu0 0
  %1295 = vmatpush1.bf16.msra.mxu0 %v714
  %1296 = vmatprep.subr.bf16.mxu0 0
  %1297 = vmatpush1.bf16.msra.mxu0 %v715
  %1298 = vmatprep.subr.bf16.mxu0 0
  %1299 = vmatpush1.bf16.msra.mxu0 0
  %1300 = vmatprep.subr.bf16.mxu0 0
  %1301 = vmatpush1.bf16.msra.mxu0 0
  %1302 = vmatprep.subr.bf16.mxu0 0
  %1303 = vmatpush1.bf16.msra.mxu0 0
  %1304 = vmatprep.subr.bf16.mxu0 0
  %1305 = vmatpush1.bf16.msra.mxu0 0
  %1306 = vmatprep.subr.bf16.mxu0 0
  %1307 = vmatpush1.bf16.msra.mxu0 0
  %1308 = vmatprep.subr.bf16.mxu0 0
  %1309 = vmatpush1.bf16.msra.mxu0 0
  %1310 = vmatprep.subr.bf16.mxu0 0
  %1311 = vmatpush1.bf16.msra.mxu0 0
  %1312 = vmatprep.subr.bf16.mxu0 0
  %1313 = vmatpush1.bf16.msra.mxu0 0
  %1314 = vmatprep.subr.bf16.mxu0 0
  %1315 = vmatpush1.bf16.msra.mxu0 0
  %1316 = vmatprep.subr.bf16.mxu0 0
  %1317 = vmatpush1.bf16.msra.mxu0 0
  %1318 = vmatprep.subr.bf16.mxu0 0
  %1319 = vmatpush1.bf16.msra.mxu0 0
  %1320 = vmatprep.subr.bf16.mxu0 0
  %1321 = vmatpush1.bf16.msra.mxu0 0
  %1322 = vmatprep.subr.bf16.mxu0 0
  %1323 = vmatpush1.bf16.msra.mxu0 0
  %1324 = vmatprep.subr.bf16.mxu0 0
  %1325 = vmatpush1.bf16.msra.mxu0 0
  %1326 = vmatprep.mubr.bf16.mxu0 0
  %1327 = vmatmul.mubr.bf16.gmra.mrb[0].mxu0 %v1292
  %v1328 = vpop.f32.mrb[0].mxu0
  %v1329 = vadd.f32 %v406, %v1328
  %v1330 = vpop.f32.mrb[0].mxu0
  %v1331 = vpop.f32.mrb[0].mxu0
  %v1332 = vpop.f32.mrb[0].mxu0
  %1333 = vdwg.mxu0
  %v1334 = vadd.f32 %v1282, %v1329
  %v1335 = vxor.u32 %v1334, 2147483648
  %v1336 = vmul.f32 %v1335, 1.442695
  %v1337 = vpow.pop %v1336
  %v1338 = vadd.f32 %v1337, 1.0
  %v1339 = vrcp.pop %v1338
  %v1340 = vmul.f32 1.0, %v1339
  %1342 = vrot.lane.b32.xlu0 %v1329, 64
  %v1343 = vpop.permute.xlu0 %1342
  %v1345 = vmul.f32 %v1340, %v1343
  %1347 = vrot.lane.b32.xlu0 %v1345, 64
  %v1348 = vpop.permute.xlu0 %1347
  %v1350 = vadd.f32 %v1282, %v1348
  %v1351 = vtanh.pop %v1350
  %v1352 = vsub.f32 1.0, %v1340
  %1354 = vrot.lane.b32.xlu0 %v1351, 96
  %v1355 = vpop.permute.xlu0 %1354
  %v1357 = vmul.f32 %v1352, %v1355
  %v1358 = vmul.f32 %v1340, %v1167
  %v1359 = vadd.f32 %v1357, %v1358
  %1360 = vmatprep.subr.bf16.mxu0 0
  %1361 = vmatpush1.bf16.msra.mxu0 %v573
  %1362 = vmatprep.subr.bf16.mxu0 0
  %1363 = vmatpush1.bf16.msra.mxu0 %v574
  %1364 = vmatprep.subr.bf16.mxu0 0
  %1365 = vmatpush1.bf16.msra.mxu0 0
  %1366 = vmatprep.subr.bf16.mxu0 0
  %1367 = vmatpush1.bf16.msra.mxu0 0
  %1368 = vmatprep.subr.bf16.mxu0 0
  %1369 = vmatpush1.bf16.msra.mxu0 0
  %1370 = vmatprep.subr.bf16.mxu0 0
  %1371 = vmatpush1.bf16.msra.mxu0 0
  %1372 = vmatprep.subr.bf16.mxu0 0
  %1373 = vmatpush1.bf16.msra.mxu0 0
  %1374 = vmatprep.subr.bf16.mxu0 0
  %1375 = vmatpush1.bf16.msra.mxu0 0
  %1376 = vmatprep.subr.bf16.mxu0 0
  %1377 = vmatpush1.bf16.msra.mxu0 0
  %1378 = vmatprep.subr.bf16.mxu0 0
  %1379 = vmatpush1.bf16.msra.mxu0 0
  %1380 = vmatprep.subr.bf16.mxu0 0
  %1381 = vmatpush1.bf16.msra.mxu0 0
  %1382 = vmatprep.subr.bf16.mxu0 0
  %1383 = vmatpush1.bf16.msra.mxu0 0
  %1384 = vmatprep.subr.bf16.mxu0 0
  %1385 = vmatpush1.bf16.msra.mxu0 0
  %1386 = vmatprep.subr.bf16.mxu0 0
  %1387 = vmatpush1.bf16.msra.mxu0 0
  %1388 = vmatprep.subr.bf16.mxu0 0
  %1389 = vmatpush1.bf16.msra.mxu0 0
  %1390 = vmatprep.subr.bf16.mxu0 0
  %1391 = vmatpush1.bf16.msra.mxu0 0
  %1392 = vmatprep.mubr.bf16.mxu0 0
  %1393 = vmatmul.mubr.bf16.gmra.mrb[0].mxu0 %v1245
  %v1394 = vpop.f32.mrb[0].mxu0
  %v1395 = vadd.f32 %v396, %v1394
  %v1396 = vpop.f32.mrb[0].mxu0
  %v1397 = vpop.f32.mrb[0].mxu0
  %v1398 = vpop.f32.mrb[0].mxu0
  %1399 = vdwg.mxu0
  %v1401 = vrot.slane %v1395, 2
  %v1403 = vadd.f32 %v521, %v1401
  %v1404 = vxor.u32 %v1403, 2147483648
  %v1405 = vmul.f32 %v1404, 1.442695
  %v1406 = vpow.pop %v1405
  %v1407 = vadd.f32 %v1406, 1.0
  %v1408 = vrcp.pop %v1407
  %v1409 = vmul.f32 1.0, %v1408
  %1410 = vrot.lane.b32.xlu0 %v1401, 64
  %v1411 = vpop.permute.xlu0 %1410
  %v1413 = vmul.f32 %v1409, %v1411
  %1415 = vrot.lane.b32.xlu0 %v1413, 64
  %v1416 = vpop.permute.xlu0 %1415
  %v1418 = vadd.f32 %v521, %v1416
  %v1419 = vtanh.pop %v1418
  %v1420 = vsub.f32 1.0, %v1409
  %1422 = vrot.lane.b32.xlu0 %v1419, 96
  %v1423 = vpop.permute.xlu0 %1422
  %v1425 = vmul.f32 %v1420, %v1423
  %v1427 = vrot.slane %v1238, 4
  %v1429 = vmul.f32 %v1409, %v1427
  %v1430 = vadd.f32 %v1425, %v1429
  %v1431 = vpack.c.bf16 %v1430, %v1430
  %v1433 = vrot.slane %v1431, 3
  %1434 = vrot.lane.b32.xlu0 %v1433, 96
  %v1435 = vpop.permute.xlu0 %1434
  %v1437 = vsel %vm577, %v1435, 0
  %1439 = vmatprep.subr.bf16.mxu0 0
  %1440 = vmatpush1.bf16.msra.mxu0 %v659
  %1441 = vmatprep.subr.bf16.mxu0 0
  %1442 = vmatpush1.bf16.msra.mxu0 %v660
  %1443 = vmatprep.subr.bf16.mxu0 0
  %1444 = vmatpush1.bf16.msra.mxu0 0
  %1445 = vmatprep.subr.bf16.mxu0 0
  %1446 = vmatpush1.bf16.msra.mxu0 0
  %1447 = vmatprep.subr.bf16.mxu0 0
  %1448 = vmatpush1.bf16.msra.mxu0 0
  %1449 = vmatprep.subr.bf16.mxu0 0
  %1450 = vmatpush1.bf16.msra.mxu0 0
  %1451 = vmatprep.subr.bf16.mxu0 0
  %1452 = vmatpush1.bf16.msra.mxu0 0
  %1453 = vmatprep.subr.bf16.mxu0 0
  %1454 = vmatpush1.bf16.msra.mxu0 0
  %1455 = vmatprep.subr.bf16.mxu0 0
  %1456 = vmatpush1.bf16.msra.mxu0 0
  %1457 = vmatprep.subr.bf16.mxu0 0
  %1458 = vmatpush1.bf16.msra.mxu0 0
  %1459 = vmatprep.subr.bf16.mxu0 0
  %1460 = vmatpush1.bf16.msra.mxu0 0
  %1461 = vmatprep.subr.bf16.mxu0 0
  %1462 = vmatpush1.bf16.msra.mxu0 0
  %1463 = vmatprep.subr.bf16.mxu0 0
  %1464 = vmatpush1.bf16.msra.mxu0 0
  %1465 = vmatprep.subr.bf16.mxu0 0
  %1466 = vmatpush1.bf16.msra.mxu0 0
  %1467 = vmatprep.subr.bf16.mxu0 0
  %1468 = vmatpush1.bf16.msra.mxu0 0
  %1469 = vmatprep.subr.bf16.mxu0 0
  %1470 = vmatpush1.bf16.msra.mxu0 0
  %1471 = vmatprep.mubr.bf16.mxu0 0
  %1472 = vmatmul.mubr.bf16.gmra.mrb[0].mxu0 %v1437
  %v1473 = vpop.f32.mrb[0].mxu0
  %v1474 = vadd.f32 %v401, %v1473
  %v1475 = vpop.f32.mrb[0].mxu0
  %v1476 = vpop.f32.mrb[0].mxu0
  %v1477 = vpop.f32.mrb[0].mxu0
  %1478 = vdwg.mxu0
  %v1479 = vpack.c.bf16 %v1359, %v1359
  %1481 = vrot.lane.b32.xlu0 %v1479, 96
  %v1482 = vpop.permute.xlu0 %1481
  %v1484 = vsel %vm577, %v1482, 0
  %1486 = vmatprep.subr.bf16.mxu0 0
  %1487 = vmatpush1.bf16.msra.mxu0 %v714
  %1488 = vmatprep.subr.bf16.mxu0 0
  %1489 = vmatpush1.bf16.msra.mxu0 %v715
  %1490 = vmatprep.subr.bf16.mxu0 0
  %1491 = vmatpush1.bf16.msra.mxu0 0
  %1492 = vmatprep.subr.bf16.mxu0 0
  %1493 = vmatpush1.bf16.msra.mxu0 0
  %1494 = vmatprep.subr.bf16.mxu0 0
  %1495 = vmatpush1.bf16.msra.mxu0 0
  %1496 = vmatprep.subr.bf16.mxu0 0
  %1497 = vmatpush1.bf16.msra.mxu0 0
  %1498 = vmatprep.subr.bf16.mxu0 0
  %1499 = vmatpush1.bf16.msra.mxu0 0
  %1500 = vmatprep.subr.bf16.mxu0 0
  %1501 = vmatpush1.bf16.msra.mxu0 0
  %1502 = vmatprep.subr.bf16.mxu0 0
  %1503 = vmatpush1.bf16.msra.mxu0 0
  %1504 = vmatprep.subr.bf16.mxu0 0
  %1505 = vmatpush1.bf16.msra.mxu0 0
  %1506 = vmatprep.subr.bf16.mxu0 0
  %1507 = vmatpush1.bf16.msra.mxu0 0
  %1508 = vmatprep.subr.bf16.mxu0 0
  %1509 = vmatpush1.bf16.msra.mxu0 0
  %1510 = vmatprep.subr.bf16.mxu0 0
  %1511 = vmatpush1.bf16.msra.mxu0 0
  %1512 = vmatprep.subr.bf16.mxu0 0
  %1513 = vmatpush1.bf16.msra.mxu0 0
  %1514 = vmatprep.subr.bf16.mxu0 0
  %1515 = vmatpush1.bf16.msra.mxu0 0
  %1516 = vmatprep.subr.bf16.mxu0 0
  %1517 = vmatpush1.bf16.msra.mxu0 0
  %1518 = vmatprep.mubr.bf16.mxu0 0
  %1519 = vmatmul.mubr.bf16.gmra.mrb[0].mxu0 %v1484
  %v1520 = vpop.f32.mrb[0].mxu0
  %v1521 = vadd.f32 %v406, %v1520
  %v1522 = vpop.f32.mrb[0].mxu0
  %v1523 = vpop.f32.mrb[0].mxu0
  %v1524 = vpop.f32.mrb[0].mxu0
  %1525 = vdwg.mxu0
  %v1526 = vadd.f32 %v1474, %v1521
  %v1527 = vxor.u32 %v1526, 2147483648
  %v1528 = vmul.f32 %v1527, 1.442695
  %v1529 = vpow.pop %v1528
  %v1530 = vadd.f32 %v1529, 1.0
  %v1531 = vrcp.pop %v1530
  %v1532 = vmul.f32 1.0, %v1531
  %1534 = vrot.lane.b32.xlu0 %v1521, 64
  %v1535 = vpop.permute.xlu0 %1534
  %v1537 = vmul.f32 %v1532, %v1535
  %1539 = vrot.lane.b32.xlu0 %v1537, 64
  %v1540 = vpop.permute.xlu0 %1539
  %v1542 = vadd.f32 %v1474, %v1540
  %v1543 = vtanh.pop %v1542
  %v1544 = vsub.f32 1.0, %v1532
  %1546 = vrot.lane.b32.xlu0 %v1543, 96
  %v1547 = vpop.permute.xlu0 %1546
  %v1549 = vmul.f32 %v1544, %v1547
  %v1550 = vmul.f32 %v1532, %v1359
  %v1551 = vadd.f32 %v1549, %v1550
  %1552 = vmatprep.subr.bf16.mxu0 0
  %1553 = vmatpush1.bf16.msra.mxu0 %v573
  %1554 = vmatprep.subr.bf16.mxu0 0
  %1555 = vmatpush1.bf16.msra.mxu0 %v574
  %1556 = vmatprep.subr.bf16.mxu0 0
  %1557 = vmatpush1.bf16.msra.mxu0 0
  %1558 = vmatprep.subr.bf16.mxu0 0
  %1559 = vmatpush1.bf16.msra.mxu0 0
  %1560 = vmatprep.subr.bf16.mxu0 0
  %1561 = vmatpush1.bf16.msra.mxu0 0
  %1562 = vmatprep.subr.bf16.mxu0 0
  %1563 = vmatpush1.bf16.msra.mxu0 0
  %1564 = vmatprep.subr.bf16.mxu0 0
  %1565 = vmatpush1.bf16.msra.mxu0 0
  %1566 = vmatprep.subr.bf16.mxu0 0
  %1567 = vmatpush1.bf16.msra.mxu0 0
  %1568 = vmatprep.subr.bf16.mxu0 0
  %1569 = vmatpush1.bf16.msra.mxu0 0
  %1570 = vmatprep.subr.bf16.mxu0 0
  %1571 = vmatpush1.bf16.msra.mxu0 0
  %1572 = vmatprep.subr.bf16.mxu0 0
  %1573 = vmatpush1.bf16.msra.mxu0 0
  %1574 = vmatprep.subr.bf16.mxu0 0
  %1575 = vmatpush1.bf16.msra.mxu0 0
  %1576 = vmatprep.subr.bf16.mxu0 0
  %1577 = vmatpush1.bf16.msra.mxu0 0
  %1578 = vmatprep.subr.bf16.mxu0 0
  %1579 = vmatpush1.bf16.msra.mxu0 0
  %1580 = vmatprep.subr.bf16.mxu0 0
  %1581 = vmatpush1.bf16.msra.mxu0 0
  %1582 = vmatprep.subr.bf16.mxu0 0
  %1583 = vmatpush1.bf16.msra.mxu0 0
  %1584 = vmatprep.mubr.bf16.mxu0 0
  %1585 = vmatmul.mubr.bf16.gmra.mrb[0].mxu0 %v1437
  %v1586 = vpop.f32.mrb[0].mxu0
  %v1587 = vadd.f32 %v396, %v1586
  %v1588 = vpop.f32.mrb[0].mxu0
  %v1589 = vpop.f32.mrb[0].mxu0
  %v1590 = vpop.f32.mrb[0].mxu0
  %1591 = vdwg.mxu0
  %v1593 = vrot.slane %v1587, 6
  %v1595 = vadd.f32 %v545, %v1593
  %v1596 = vxor.u32 %v1595, 2147483648
  %v1597 = vmul.f32 %v1596, 1.442695
  %v1598 = vpow.pop %v1597
  %v1599 = vadd.f32 %v1598, 1.0
  %v1600 = vrcp.pop %v1599
  %v1601 = vmul.f32 1.0, %v1600
  %1602 = vrot.lane.b32.xlu0 %v1593, 64
  %v1603 = vpop.permute.xlu0 %1602
  %v1605 = vmul.f32 %v1601, %v1603
  %1607 = vrot.lane.b32.xlu0 %v1605, 64
  %v1608 = vpop.permute.xlu0 %1607
  %v1610 = vadd.f32 %v545, %v1608
  %v1611 = vtanh.pop %v1610
  %v1612 = vsub.f32 1.0, %v1601
  %1614 = vrot.lane.b32.xlu0 %v1611, 96
  %v1615 = vpop.permute.xlu0 %1614
  %v1617 = vmul.f32 %v1612, %v1615
  %v1619 = vrot.slane %v1430, 4
  %v1621 = vmul.f32 %v1601, %v1619
  %v1622 = vadd.f32 %v1617, %v1621
  %v1623 = vpack.c.bf16 %v1622, %v1622
  %v1625 = vrot.slane %v1623, 1
  %1626 = vrot.lane.b32.xlu0 %v1625, 96
  %v1627 = vpop.permute.xlu0 %1626
  %v1629 = vsel %vm577, %v1627, 0
  %1631 = vmatprep.subr.bf16.mxu0 0
  %1632 = vmatpush1.bf16.msra.mxu0 %v659
  %1633 = vmatprep.subr.bf16.mxu0 0
  %1634 = vmatpush1.bf16.msra.mxu0 %v660
  %1635 = vmatprep.subr.bf16.mxu0 0
  %1636 = vmatpush1.bf16.msra.mxu0 0
  %1637 = vmatprep.subr.bf16.mxu0 0
  %1638 = vmatpush1.bf16.msra.mxu0 0
  %1639 = vmatprep.subr.bf16.mxu0 0
  %1640 = vmatpush1.bf16.msra.mxu0 0
  %1641 = vmatprep.subr.bf16.mxu0 0
  %1642 = vmatpush1.bf16.msra.mxu0 0
  %1643 = vmatprep.subr.bf16.mxu0 0
  %1644 = vmatpush1.bf16.msra.mxu0 0
  %1645 = vmatprep.subr.bf16.mxu0 0
  %1646 = vmatpush1.bf16.msra.mxu0 0
  %1647 = vmatprep.subr.bf16.mxu0 0
  %1648 = vmatpush1.bf16.msra.mxu0 0
  %1649 = vmatprep.subr.bf16.mxu0 0
  %1650 = vmatpush1.bf16.msra.mxu0 0
  %1651 = vmatprep.subr.bf16.mxu0 0
  %1652 = vmatpush1.bf16.msra.mxu0 0
  %1653 = vmatprep.subr.bf16.mxu0 0
  %1654 = vmatpush1.bf16.msra.mxu0 0
  %1655 = vmatprep.subr.bf16.mxu0 0
  %1656 = vmatpush1.bf16.msra.mxu0 0
  %1657 = vmatprep.subr.bf16.mxu0 0
  %1658 = vmatpush1.bf16.msra.mxu0 0
  %1659 = vmatprep.subr.bf16.mxu0 0
  %1660 = vmatpush1.bf16.msra.mxu0 0
  %1661 = vmatprep.subr.bf16.mxu0 0
  %1662 = vmatpush1.bf16.msra.mxu0 0
  %1663 = vmatprep.mubr.bf16.mxu0 0
  %1664 = vmatmul.mubr.bf16.gmra.mrb[0].mxu0 %v1629
  %v1665 = vpop.f32.mrb[0].mxu0
  %v1666 = vadd.f32 %v401, %v1665
  %v1667 = vpop.f32.mrb[0].mxu0
  %v1668 = vpop.f32.mrb[0].mxu0
  %v1669 = vpop.f32.mrb[0].mxu0
  %1670 = vdwg.mxu0
  %v1671 = vpack.c.bf16 %v1551, %v1551
  %1673 = vrot.lane.b32.xlu0 %v1671, 96
  %v1674 = vpop.permute.xlu0 %1673
  %v1676 = vsel %vm577, %v1674, 0
  %1678 = vmatprep.subr.bf16.mxu0 0
  %1679 = vmatpush1.bf16.msra.mxu0 %v714
  %1680 = vmatprep.subr.bf16.mxu0 0
  %1681 = vmatpush1.bf16.msra.mxu0 %v715
  %1682 = vmatprep.subr.bf16.mxu0 0
  %1683 = vmatpush1.bf16.msra.mxu0 0
  %1684 = vmatprep.subr.bf16.mxu0 0
  %1685 = vmatpush1.bf16.msra.mxu0 0
  %1686 = vmatprep.subr.bf16.mxu0 0
  %1687 = vmatpush1.bf16.msra.mxu0 0
  %1688 = vmatprep.subr.bf16.mxu0 0
  %1689 = vmatpush1.bf16.msra.mxu0 0
  %1690 = vmatprep.subr.bf16.mxu0 0
  %1691 = vmatpush1.bf16.msra.mxu0 0
  %1692 = vmatprep.subr.bf16.mxu0 0
  %1693 = vmatpush1.bf16.msra.mxu0 0
  %1694 = vmatprep.subr.bf16.mxu0 0
  %1695 = vmatpush1.bf16.msra.mxu0 0
  %1696 = vmatprep.subr.bf16.mxu0 0
  %1697 = vmatpush1.bf16.msra.mxu0 0
  %1698 = vmatprep.subr.bf16.mxu0 0
  %1699 = vmatpush1.bf16.msra.mxu0 0
  %1700 = vmatprep.subr.bf16.mxu0 0
  %1701 = vmatpush1.bf16.msra.mxu0 0
  %1702 = vmatprep.subr.bf16.mxu0 0
  %1703 = vmatpush1.bf16.msra.mxu0 0
  %1704 = vmatprep.subr.bf16.mxu0 0
  %1705 = vmatpush1.bf16.msra.mxu0 0
  %1706 = vmatprep.subr.bf16.mxu0 0
  %1707 = vmatpush1.bf16.msra.mxu0 0
  %1708 = vmatprep.subr.bf16.mxu0 0
  %1709 = vmatpush1.bf16.msra.mxu0 0
  %1710 = vmatprep.mubr.bf16.mxu0 0
  %1711 = vmatmul.mubr.bf16.gmra.mrb[0].mxu0 %v1676
  %v1712 = vpop.f32.mrb[0].mxu0
  %v1713 = vadd.f32 %v406, %v1712
  %v1714 = vpop.f32.mrb[0].mxu0
  %v1715 = vpop.f32.mrb[0].mxu0
  %v1716 = vpop.f32.mrb[0].mxu0
  %1717 = vdwg.mxu0
  %v1718 = vadd.f32 %v1666, %v1713
  %v1719 = vxor.u32 %v1718, 2147483648
  %v1720 = vmul.f32 %v1719, 1.442695
  %v1721 = vpow.pop %v1720
  %v1722 = vadd.f32 %v1721, 1.0
  %v1723 = vrcp.pop %v1722
  %v1724 = vmul.f32 1.0, %v1723
  %1726 = vrot.lane.b32.xlu0 %v1713, 64
  %v1727 = vpop.permute.xlu0 %1726
  %v1729 = vmul.f32 %v1724, %v1727
  %1731 = vrot.lane.b32.xlu0 %v1729, 64
  %v1732 = vpop.permute.xlu0 %1731
  %v1734 = vadd.f32 %v1666, %v1732
  %v1735 = vtanh.pop %v1734
  %v1736 = vsub.f32 1.0, %v1724
  %1738 = vrot.lane.b32.xlu0 %v1735, 96
  %v1739 = vpop.permute.xlu0 %1738
  %v1741 = vmul.f32 %v1736, %v1739
  %v1742 = vmul.f32 %v1724, %v1551
  %v1743 = vadd.f32 %v1741, %v1742
  %1744 = vmatprep.subr.bf16.mxu0 0
  %1745 = vmatpush1.bf16.msra.mxu0 %v573
  %1746 = vmatprep.subr.bf16.mxu0 0
  %1747 = vmatpush1.bf16.msra.mxu0 %v574
  %1748 = vmatprep.subr.bf16.mxu0 0
  %1749 = vmatpush1.bf16.msra.mxu0 0
  %1750 = vmatprep.subr.bf16.mxu0 0
  %1751 = vmatpush1.bf16.msra.mxu0 0
  %1752 = vmatprep.subr.bf16.mxu0 0
  %1753 = vmatpush1.bf16.msra.mxu0 0
  %1754 = vmatprep.subr.bf16.mxu0 0
  %1755 = vmatpush1.bf16.msra.mxu0 0
  %1756 = vmatprep.subr.bf16.mxu0 0
  %1757 = vmatpush1.bf16.msra.mxu0 0
  %1758 = vmatprep.subr.bf16.mxu0 0
  %1759 = vmatpush1.bf16.msra.mxu0 0
  %1760 = vmatprep.subr.bf16.mxu0 0
  %1761 = vmatpush1.bf16.msra.mxu0 0
  %1762 = vmatprep.subr.bf16.mxu0 0
  %1763 = vmatpush1.bf16.msra.mxu0 0
  %1764 = vmatprep.subr.bf16.mxu0 0
  %1765 = vmatpush1.bf16.msra.mxu0 0
  %1766 = vmatprep.subr.bf16.mxu0 0
  %1767 = vmatpush1.bf16.msra.mxu0 0
  %1768 = vmatprep.subr.bf16.mxu0 0
  %1769 = vmatpush1.bf16.msra.mxu0 0
  %1770 = vmatprep.subr.bf16.mxu0 0
  %1771 = vmatpush1.bf16.msra.mxu0 0
  %1772 = vmatprep.subr.bf16.mxu0 0
  %1773 = vmatpush1.bf16.msra.mxu0 0
  %1774 = vmatprep.subr.bf16.mxu0 0
  %1775 = vmatpush1.bf16.msra.mxu0 0
  %1776 = vmatprep.mubr.bf16.mxu0 0
  %1777 = vmatmul.mubr.bf16.gmra.mrb[0].mxu0 %v1629
  %v1778 = vpop.f32.mrb[0].mxu0
  %v1779 = vadd.f32 %v396, %v1778
  %v1780 = vpop.f32.mrb[0].mxu0
  %v1781 = vpop.f32.mrb[0].mxu0
  %v1782 = vpop.f32.mrb[0].mxu0
  %1783 = vdwg.mxu0
  %v1785 = vrot.slane %v1779, 2
  %v1787 = vadd.f32 %v564, %v1785
  %v1788 = vxor.u32 %v1787, 2147483648
  %v1789 = vmul.f32 %v1788, 1.442695
  %v1790 = vpow.pop %v1789
  %v1791 = vadd.f32 %v1790, 1.0
  %v1792 = vrcp.pop %v1791
  %v1793 = vmul.f32 1.0, %v1792
  %1794 = vrot.lane.b32.xlu0 %v1785, 64
  %v1795 = vpop.permute.xlu0 %1794
  %v1797 = vmul.f32 %v1793, %v1795
  %1799 = vrot.lane.b32.xlu0 %v1797, 64
  %v1800 = vpop.permute.xlu0 %1799
  %v1802 = vadd.f32 %v564, %v1800
  %v1803 = vtanh.pop %v1802
  %v1804 = vsub.f32 1.0, %v1793
  %1806 = vrot.lane.b32.xlu0 %v1803, 96
  %v1807 = vpop.permute.xlu0 %1806
  %v1809 = vmul.f32 %v1804, %v1807
  %v1811 = vrot.slane %v1622, 4
  %v1813 = vmul.f32 %v1793, %v1811
  %v1814 = vadd.f32 %v1809, %v1813
  %v1815 = vpack.c.bf16 %v1814, %v1814
  %v1817 = vrot.slane %v1815, 3
  %1818 = vrot.lane.b32.xlu0 %v1817, 96
  %v1819 = vpop.permute.xlu0 %1818
  %v1821 = vsel %vm577, %v1819, 0
  %1823 = vmatprep.subr.bf16.mxu0 0
  %1824 = vmatpush1.bf16.msra.mxu0 %v659
  %1825 = vmatprep.subr.bf16.mxu0 0
  %1826 = vmatpush1.bf16.msra.mxu0 %v660
  %1827 = vmatprep.subr.bf16.mxu0 0
  %1828 = vmatpush1.bf16.msra.mxu0 0
  %1829 = vmatprep.subr.bf16.mxu0 0
  %1830 = vmatpush1.bf16.msra.mxu0 0
  %1831 = vmatprep.subr.bf16.mxu0 0
  %1832 = vmatpush1.bf16.msra.mxu0 0
  %1833 = vmatprep.subr.bf16.mxu0 0
  %1834 = vmatpush1.bf16.msra.mxu0 0
  %1835 = vmatprep.subr.bf16.mxu0 0
  %1836 = vmatpush1.bf16.msra.mxu0 0
  %1837 = vmatprep.subr.bf16.mxu0 0
  %1838 = vmatpush1.bf16.msra.mxu0 0
  %1839 = vmatprep.subr.bf16.mxu0 0
  %1840 = vmatpush1.bf16.msra.mxu0 0
  %1841 = vmatprep.subr.bf16.mxu0 0
  %1842 = vmatpush1.bf16.msra.mxu0 0
  %1843 = vmatprep.subr.bf16.mxu0 0
  %1844 = vmatpush1.bf16.msra.mxu0 0
  %1845 = vmatprep.subr.bf16.mxu0 0
  %1846 = vmatpush1.bf16.msra.mxu0 0
  %1847 = vmatprep.subr.bf16.mxu0 0
  %1848 = vmatpush1.bf16.msra.mxu0 0
  %1849 = vmatprep.subr.bf16.mxu0 0
  %1850 = vmatpush1.bf16.msra.mxu0 0
  %1851 = vmatprep.subr.bf16.mxu0 0
  %1852 = vmatpush1.bf16.msra.mxu0 0
  %1853 = vmatprep.subr.bf16.mxu0 0
  %1854 = vmatpush1.bf16.msra.mxu0 0
  %1855 = vmatprep.mubr.bf16.mxu0 0
  %1856 = vmatmul.mubr.bf16.gmra.mrb[0].mxu0 %v1821
  %v1857 = vpop.f32.mrb[0].mxu0
  %v1858 = vadd.f32 %v401, %v1857
  %v1859 = vpop.f32.mrb[0].mxu0
  %v1860 = vpop.f32.mrb[0].mxu0
  %v1861 = vpop.f32.mrb[0].mxu0
  %1862 = vdwg.mxu0
  %v1863 = vpack.c.bf16 %v1743, %v1743
  %1865 = vrot.lane.b32.xlu0 %v1863, 96
  %v1866 = vpop.permute.xlu0 %1865
  %v1868 = vsel %vm577, %v1866, 0
  %1870 = vmatprep.subr.bf16.mxu0 0
  %1871 = vmatpush1.bf16.msra.mxu0 %v714
  %1872 = vmatprep.subr.bf16.mxu0 0
  %1873 = vmatpush1.bf16.msra.mxu0 %v715
  %1874 = vmatprep.subr.bf16.mxu0 0
  %1875 = vmatpush1.bf16.msra.mxu0 0
  %1876 = vmatprep.subr.bf16.mxu0 0
  %1877 = vmatpush1.bf16.msra.mxu0 0
  %1878 = vmatprep.subr.bf16.mxu0 0
  %1879 = vmatpush1.bf16.msra.mxu0 0
  %1880 = vmatprep.subr.bf16.mxu0 0
  %1881 = vmatpush1.bf16.msra.mxu0 0
  %1882 = vmatprep.subr.bf16.mxu0 0
  %1883 = vmatpush1.bf16.msra.mxu0 0
  %1884 = vmatprep.subr.bf16.mxu0 0
  %1885 = vmatpush1.bf16.msra.mxu0 0
  %1886 = vmatprep.subr.bf16.mxu0 0
  %1887 = vmatpush1.bf16.msra.mxu0 0
  %1888 = vmatprep.subr.bf16.mxu0 0
  %1889 = vmatpush1.bf16.msra.mxu0 0
  %1890 = vmatprep.subr.bf16.mxu0 0
  %1891 = vmatpush1.bf16.msra.mxu0 0
  %1892 = vmatprep.subr.bf16.mxu0 0
  %1893 = vmatpush1.bf16.msra.mxu0 0
  %1894 = vmatprep.subr.bf16.mxu0 0
  %1895 = vmatpush1.bf16.msra.mxu0 0
  %1896 = vmatprep.subr.bf16.mxu0 0
  %1897 = vmatpush1.bf16.msra.mxu0 0
  %1898 = vmatprep.subr.bf16.mxu0 0
  %1899 = vmatpush1.bf16.msra.mxu0 0
  %1900 = vmatprep.subr.bf16.mxu0 0
  %1901 = vmatpush1.bf16.msra.mxu0 0
  %1902 = vmatprep.mubr.bf16.mxu0 0
  %1903 = vmatmul.mubr.bf16.gmra.mrb[0].mxu0 %v1868
  %v1904 = vpop.f32.mrb[0].mxu0
  %v1905 = vadd.f32 %v406, %v1904
  %v1906 = vpop.f32.mrb[0].mxu0
  %v1907 = vpop.f32.mrb[0].mxu0
  %v1908 = vpop.f32.mrb[0].mxu0
  %1909 = vdwg.mxu0
  %v1910 = vadd.f32 %v1858, %v1905
  %v1911 = vxor.u32 %v1910, 2147483648
  %v1912 = vmul.f32 %v1911, 1.442695
  %v1913 = vpow.pop %v1912
  %v1914 = vadd.f32 %v1913, 1.0
  %v1915 = vrcp.pop %v1914
  %v1916 = vmul.f32 1.0, %v1915
  %1918 = vrot.lane.b32.xlu0 %v1905, 64
  %v1919 = vpop.permute.xlu0 %1918
  %v1921 = vmul.f32 %v1916, %v1919
  %1923 = vrot.lane.b32.xlu0 %v1921, 64
  %v1924 = vpop.permute.xlu0 %1923
  %v1926 = vadd.f32 %v1858, %v1924
  %v1927 = vtanh.pop %v1926
  %v1928 = vsub.f32 1.0, %v1916
  %1930 = vrot.lane.b32.xlu0 %v1927, 96
  %v1931 = vpop.permute.xlu0 %1930
  %v1933 = vmul.f32 %v1928, %v1931
  %v1934 = vmul.f32 %v1916, %v1743
  %v1935 = vadd.f32 %v1933, %v1934
  %v1937 = vrot.slane %v975, 6
  %v1940 = vrot.slane %v1167, 4
  %v1943 = vrot.slane %v1359, 2
  %v1946 = vrot.slane %v1743, 6
  %v1949 = vrot.slane %v1935, 4
  %vm1951 = vcmask 1041408
  %v1952 = vsel %vm1951, %v783, %v1937
  %v1953 = vsel %vm171, %v1952, %v1940
  %vm1954 = vcmask 1045504
  %v1955 = vsel %vm1954, %v1953, %v1943
  %v1956 = vsel %vm1951, %v1551, %v1946
  %v1957 = vsel %vm171, %v1956, %v1949
  %1960 = vrot.lane.b32.xlu0 %v1955, 96
  %v1961 = vpop.permute.xlu0 %1960
  %1962 = vrot.lane.b32.xlu0 %v1957, 96
  %v1963 = vpop.permute.xlu0 %1962
  %1966 = vst.msk [vmem:[%s5] sm:$0xff] %vm577, %v1961
  %vm1967 = vcmask 259072
  %1968 = vst.msk [vmem:[%s5 + $0x8] sm:$0x3f] %vm1967, %v1963
  // Predicated region
  $region22: #{bgru_forward.1} parent=0 // pred_check
    _
  $region23: #{bgru_forward.1} parent=0 // pred_check_branch
    %1970 = sbr.rel (0) target = $region25
  $region24: #{bgru_forward.1} parent=0 // pred_region
    _
  $region25: #{bgru_forward.1} parent=0 // pred_fallthru
    _
  // Predicated region
  $region26: #{bgru_forward.1} parent=0 // pred_check
    _
  $region27: #{bgru_forward.1} parent=0 // pred_check_branch
    %1972 = sbr.rel (0) target = $region29
  $region28: #{bgru_forward.1} parent=0 // pred_region
    _
  $region29: #{bgru_forward.1} parent=0 // pred_fallthru
    _

</llo_original>
